<compile_context>
chip_gen: v7x
topology: tpu7x:2x2x1
jax: 0.10.0
libtpu: 0.0.40
codegen_flags: <defaults>
</compile_context>

<pallas_src>
import functools

import jax
import jax.numpy as jnp
from jax.experimental import pallas as pl
from jax.experimental.pallas import tpu as pltpu

IN_FEATURES = 32
HIDDEN = 32
OUT_FEATURES = 16
LAYER_NUM = 4
SKIPS = (2,)
LN_EPS = 1e-5

LAYER_STRIDE = 128                      # one 128-lane stripe per layer
SLAB_SHAPE = (HIDDEN, LAYER_NUM * LAYER_STRIDE)


def _round_up(a, b):
    return ((a + b - 1) // b) * b


# ---------------------------------------------------------------------------
# Kernel
# ---------------------------------------------------------------------------

def _norm_mlp_kernel(x_ref, p_ref, o_ref, *, chunk, mm_dtype):
    """One grid step: all 4 layers over a (tile_n, 32) row-major block.

    x_ref: (tile_n, IN_FEATURES)  row-major input block (VMEM)
    p_ref: (HIDDEN, LAYER_NUM*128) packed parameter slab (VMEM, resident)
    o_ref: (tile_n, OUT_FEATURES) row-major output block (VMEM)
    """
    num_chunks = x_ref.shape[0] // chunk

    @pl.loop(0, num_chunks)
    def _chunk(c):
        c0 = pl.multiple_of(c * chunk, 128)

        # Row-major -> feature-major (points on lanes): one XLU transpose.
        xc = x_ref[pl.ds(c0, chunk), :].astype(jnp.float32)      # (chunk, 32)
        xt = jnp.transpose(xc)                                    # (32, chunk)

        h = xt
        xskip = xt
        for i in range(LAYER_NUM - 1):                            # hidden layers
            base = i * LAYER_STRIDE
            in_ch = IN_FEATURES if i == 0 else HIDDEN
            w = p_ref[:, base:base + in_ch]                       # (HIDDEN, in_ch)
            b = p_ref[:, base + in_ch:base + in_ch + 1]           # (HIDDEN, 1)
            g = p_ref[:, base + in_ch + 1:base + in_ch + 2]       # (HIDDEN, 1)
            bt = p_ref[:, base + in_ch + 2:base + in_ch + 3]      # (HIDDEN, 1)

            # fc: (out, in) @ (in, chunk) on the MXU, bf16 operands, f32 acc.
            h = jnp.dot(w.astype(mm_dtype), h.astype(mm_dtype),
                        preferred_element_type=jnp.float32) + b
            if i in SKIPS:
                h = h + xskip
            # LayerNorm over the feature (sublane) axis — two-pass variance.
            mu = jnp.sum(h, axis=0, keepdims=True) * (1.0 / HIDDEN)
            d = h - mu
            var = jnp.sum(d * d, axis=0, keepdims=True) * (1.0 / HIDDEN)
            h = d * jax.lax.rsqrt(var + LN_EPS) * g + bt
            h = jnp.maximum(h, 0.0)                               # ReLU
            if i in SKIPS:
                xskip = h

        # Last layer: emit the row-major (chunk, OUT_FEATURES) output directly.
        base = (LAYER_NUM - 1) * LAYER_STRIDE
        w_t = p_ref[:, base:base + OUT_FEATURES]                  # (HIDDEN, OUT) = W_last^T
        b_row = p_ref[0:1, base + OUT_FEATURES:base + 2 * OUT_FEATURES]  # (1, OUT)
        h_rm = jnp.transpose(h)                                   # (chunk, HIDDEN)
        out = jnp.dot(h_rm.astype(mm_dtype), w_t.astype(mm_dtype),
                      preferred_element_type=jnp.float32) + b_row
        if (LAYER_NUM - 1) in SKIPS:   # not hit for this config (skip at layer 2)
            out = out + jnp.transpose(xskip)
        o_ref[pl.ds(c0, chunk), :] = out.astype(o_ref.dtype)


# ---------------------------------------------------------------------------
# Wrapper
# ---------------------------------------------------------------------------

def norm_mlp_pallas(x, param_slab, *, tile_n_max=8192, chunk_n=512,
                    matmul_dtype=jnp.bfloat16):
    """x: (N, IN_FEATURES) row-major.  Returns (N, OUT_FEATURES) in x.dtype."""
    N, F = x.shape
    assert F == IN_FEATURES
    assert param_slab.shape == SLAB_SHAPE

    # Lane-chunk (inner loop width, multiple of 128) and balanced tiling.
    chunk = max(128, min(_round_up(chunk_n, 128), _round_up(N, 128)))
    n_chunks = pl.cdiv(N, chunk)
    tiles_cap = max(1, tile_n_max // chunk)
    num_tiles = pl.cdiv(n_chunks, tiles_cap)
    if n_chunks >= 2:
        num_tiles = max(num_tiles, 2)       # keep both v7x TensorCores busy
    tile_chunks = pl.cdiv(n_chunks, num_tiles)
    tile_n = tile_chunks * chunk
    n_pad = num_tiles * tile_n

    xp = x
    if n_pad != N:
        # Only for ragged N; balanced tiling keeps the padding small.
        xp = jnp.pad(x, ((0, n_pad - N), (0, 0)))

    kernel = functools.partial(_norm_mlp_kernel, chunk=chunk, mm_dtype=matmul_dtype)

    cost = pl.CostEstimate(
        flops=2 * n_pad * (HIDDEN * HIDDEN * (LAYER_NUM - 1) + HIDDEN * OUT_FEATURES),
        transcendentals=(LAYER_NUM - 1) * n_pad,
        bytes_accessed=n_pad * x.dtype.itemsize * (IN_FEATURES + OUT_FEATURES)
        + SLAB_SHAPE[0] * SLAB_SHAPE[1] * 4,
    )

    out = pl.pallas_call(
        kernel,
        out_shape=jax.ShapeDtypeStruct((n_pad, OUT_FEATURES), x.dtype),
        grid_spec=pltpu.PrefetchScalarGridSpec(
            num_scalar_prefetch=0,
            grid=(num_tiles,),
            in_specs=[
                pl.BlockSpec((tile_n, IN_FEATURES), lambda i: (i, 0)),
                pl.BlockSpec(SLAB_SHAPE, lambda i: (0, 0)),      # resident params
            ],
            out_specs=pl.BlockSpec((tile_n, OUT_FEATURES), lambda i: (i, 0)),
        ),
        compiler_params=pltpu.CompilerParams(
            dimension_semantics=("parallel",)),
        cost_estimate=cost,
    )(xp, param_slab)

    if n_pad != N:
        out = out[:N]
    return out


# ---------------------------------------------------------------------------
# Parameters + plain-JAX reference (mirrors NormMlp.forward exactly)
# ---------------------------------------------------------------------------

def init_params(key):
    params = []
    for i in range(LAYER_NUM):
        in_ch = IN_FEATURES if i == 0 else HIDDEN
        out_ch = OUT_FEATURES if i == LAYER_NUM - 1 else HIDDEN
        key, kw, kb = jax.random.split(key, 3)
        layer = {
            "w": jax.random.normal(kw, (out_ch, in_ch), jnp.float32) * 0.1,
            "b": jax.random.normal(kb, (out_ch,), jnp.float32) * 0.01,
        }
        if i < LAYER_NUM - 1:
            layer["gamma"] = jnp.ones((out_ch,), jnp.float32)    # torch LN defaults
            layer["beta"] = jnp.zeros((out_ch,), jnp.float32)
        params.append(layer)
    return params, key


def pack_params(params):
    """Pack all layer parameters into one (32, 512) f32 slab.

    Stripe i = lanes [128*i, 128*(i+1)):
      hidden layer i:  cols [0,in_ch)=W_i (torch (out,in)); in_ch=b; +1=gamma; +2=beta
      last layer:      cols [0,out_ch)=W_last^T ((in,out));
                       row 0, cols [out_ch, 2*out_ch)=b_last
    """
    slab = jnp.zeros(SLAB_SHAPE, jnp.float32)
    for i, lp in enumerate(params):
        base = i * LAYER_STRIDE
        out_ch, in_ch = lp["w"].shape
        if i < LAYER_NUM - 1:
            slab = slab.at[:out_ch, base:base + in_ch].set(lp["w"])
            slab = slab.at[:out_ch, base + in_ch].set(lp["b"])
            slab = slab.at[:out_ch, base + in_ch + 1].set(lp["gamma"])
            slab = slab.at[:out_ch, base + in_ch + 2].set(lp["beta"])
        else:
            slab = slab.at[:in_ch, base:base + out_ch].set(lp["w"].T)
            slab = slab.at[0, base + out_ch:base + 2 * out_ch].set(lp["b"])
    return slab


def norm_mlp_reference(x, params, matmul_dtype=jnp.float32):
    """Pure-JAX reference.  matmul_dtype=bf16 mirrors the kernel's MXU casts."""
    h = x.astype(jnp.float32)
    xs = h
    for i, lp in enumerate(params):
        h = jnp.dot(h.astype(matmul_dtype), lp["w"].astype(matmul_dtype).T,
                    preferred_element_type=jnp.float32) + lp["b"]
        if i in SKIPS:
            h = h + xs
        if i < LAYER_NUM - 1:
            mu = jnp.mean(h, axis=-1, keepdims=True)
            var = jnp.mean((h - mu) ** 2, axis=-1, keepdims=True)
            h = (h - mu) * jax.lax.rsqrt(var + LN_EPS) * lp["gamma"] + lp["beta"]
            h = jnp.maximum(h, 0.0)
        if i in SKIPS:
            xs = h
    return h


if __name__ == "__main__":
    key = jax.random.PRNGKey(0)
    params, key = init_params(key)
    slab = pack_params(params)

    # Clean multiple-of-tile case (2 grid steps) + ragged small case (padding path).
    for n in (2048, 300):
        key, kx = jax.random.split(key)
        x = jax.random.normal(kx, (n, IN_FEATURES), jnp.float32)

        out = jax.block_until_ready(norm_mlp_pallas(x, slab))
        assert out.shape == (n, OUT_FEATURES)
        assert bool(jnp.all(jnp.isfinite(out)))

        # Strict check: identical bf16-operand / f32-accumulate math in pure JAX.
        ref_bf16 = norm_mlp_reference(x, params, matmul_dtype=jnp.bfloat16)
        assert jnp.allclose(out, ref_bf16, atol=2e-3, rtol=2e-3), \
            "mismatch vs bf16-operand reference"

        # Sanity check against the full-f32 module semantics.
        ref_f32 = norm_mlp_reference(x, params)
        assert jnp.allclose(out, ref_f32, atol=5e-2, rtol=5e-2), \
            "mismatch vs f32 reference"

    print("KERNEL_OK")
</pallas_src>

<mosaic_0001>
module attributes {stable_mosaic.version = 11 : i64} {
  func.func @_norm_mlp_kernel(%arg0: i32, %arg1: memref<1024x32xf32, #tpu.memory_space<vmem>>, %arg2: memref<32x512xf32, #tpu.memory_space<vmem>>, %arg3: memref<1024x16xf32, #tpu.memory_space<vmem>>) attributes {dimension_semantics = [#tpu.dimension_semantics<parallel>], iteration_bounds = array<i64: 2>, scalar_prefetch = 0 : i64, scratch_operands = 0 : i64, tpu.core_type = #tpu.core_type<tc>, window_params = [{transform_indices = @transform_0, window_bounds = array<i64: 1024, 32>}, {pipeline_mode = #tpu.pipeline_mode<synchronous>, transform_indices = @transform_1, window_bounds = array<i64: 32, 512>}, {transform_indices = @transform_2, window_bounds = array<i64: 1024, 16>}]} {
    %c0_i32 = arith.constant 0 : i32
    %c2_i32 = arith.constant 2 : i32
    %0 = arith.addi %c0_i32, %c2_i32 : i32
    %c1_i32 = arith.constant 1 : i32
    scf.for %arg4 = %c0_i32 to %0 step %c1_i32  : i32 {
      %c1_i32_1 = arith.constant 1 : i32
      %1 = arith.muli %arg4, %c1_i32_1 : i32
      %c0_i32_2 = arith.constant 0 : i32
      %2 = arith.addi %c0_i32_2, %1 : i32
      %c512_i32 = arith.constant 512 : i32
      %3 = arith.muli %2, %c512_i32 : i32
      %4 = tpu.assume_multiple %3, 128 : i32
      %5 = arith.index_cast %4 : i32 to index
      %c0 = arith.constant 0 : index
      %6 = vector.load %arg1[%5, %c0] : memref<1024x32xf32, #tpu.memory_space<vmem>>, vector<512x32xf32>
      %7 = tpu.transpose %6, [1, 0] : vector<512x32xf32> -> vector<32x512xf32>
      %c0_3 = arith.constant 0 : index
      %c0_4 = arith.constant 0 : index
      %8 = vector.load %arg2[%c0_3, %c0_4] : memref<32x512xf32, #tpu.memory_space<vmem>>, vector<32x32xf32>
      %c0_5 = arith.constant 0 : index
      %c32 = arith.constant 32 : index
      %9 = vector.load %arg2[%c0_5, %c32] : memref<32x512xf32, #tpu.memory_space<vmem>>, vector<32x1xf32>
      %c0_6 = arith.constant 0 : index
      %c33 = arith.constant 33 : index
      %10 = vector.load %arg2[%c0_6, %c33] : memref<32x512xf32, #tpu.memory_space<vmem>>, vector<32x1xf32>
      %c0_7 = arith.constant 0 : index
      %c34 = arith.constant 34 : index
      %11 = vector.load %arg2[%c0_7, %c34] : memref<32x512xf32, #tpu.memory_space<vmem>>, vector<32x1xf32>
      %12 = arith.truncf %8 : vector<32x32xf32> to vector<32x32xbf16>
      %13 = arith.truncf %7 : vector<32x512xf32> to vector<32x512xbf16>
      %cst = arith.constant dense<0.000000e+00> : vector<32x512xf32>
      %14 = tpu.matmul %12, %13, %cst {dimension_numbers = #tpu.dot_dimension_numbers<[1], [0], [0], [1], [0, 0, 1, 1], [], []>} : vector<32x32xbf16>, vector<32x512xbf16>, vector<32x512xf32> -> vector<32x512xf32>
      %15 = vector.broadcast %9 : vector<32x1xf32> to vector<32x512xf32>
      %16 = arith.addf %14, %15 : vector<32x512xf32>
      %cst_8 = arith.constant dense<0.000000e+00> : vector<512xf32>
      %17 = vector.multi_reduction <add>, %16, %cst_8 [0] : vector<32x512xf32> to vector<512xf32>
      %18 = vector.shape_cast %17 : vector<512xf32> to vector<1x512xf32>
      %cst_9 = arith.constant 3.125000e-02 : f32
      %19 = vector.broadcast %cst_9 : f32 to vector<1x512xf32>
      %20 = arith.mulf %18, %19 : vector<1x512xf32>
      %21 = vector.broadcast %20 : vector<1x512xf32> to vector<32x512xf32>
      %22 = arith.subf %16, %21 : vector<32x512xf32>
      %23 = arith.mulf %22, %22 : vector<32x512xf32>
      %cst_10 = arith.constant dense<0.000000e+00> : vector<512xf32>
      %24 = vector.multi_reduction <add>, %23, %cst_10 [0] : vector<32x512xf32> to vector<512xf32>
      %25 = vector.shape_cast %24 : vector<512xf32> to vector<1x512xf32>
      %cst_11 = arith.constant 3.125000e-02 : f32
      %26 = vector.broadcast %cst_11 : f32 to vector<1x512xf32>
      %27 = arith.mulf %25, %26 : vector<1x512xf32>
      %cst_12 = arith.constant 9.99999974E-6 : f32
      %28 = vector.broadcast %cst_12 : f32 to vector<1x512xf32>
      %29 = arith.addf %27, %28 : vector<1x512xf32>
      %30 = math.rsqrt %29 : vector<1x512xf32>
      %31 = vector.broadcast %30 : vector<1x512xf32> to vector<32x512xf32>
      %32 = arith.mulf %22, %31 : vector<32x512xf32>
      %33 = vector.broadcast %10 : vector<32x1xf32> to vector<32x512xf32>
      %34 = arith.mulf %32, %33 : vector<32x512xf32>
      %35 = vector.broadcast %11 : vector<32x1xf32> to vector<32x512xf32>
      %36 = arith.addf %34, %35 : vector<32x512xf32>
      %cst_13 = arith.constant 0.000000e+00 : f32
      %37 = vector.broadcast %cst_13 : f32 to vector<32x512xf32>
      %38 = arith.maximumf %36, %37 : vector<32x512xf32>
      %c0_14 = arith.constant 0 : index
      %c128 = arith.constant 128 : index
      %39 = vector.load %arg2[%c0_14, %c128] : memref<32x512xf32, #tpu.memory_space<vmem>>, vector<32x32xf32>
      %c0_15 = arith.constant 0 : index
      %c160 = arith.constant 160 : index
      %40 = vector.load %arg2[%c0_15, %c160] : memref<32x512xf32, #tpu.memory_space<vmem>>, vector<32x1xf32>
      %c0_16 = arith.constant 0 : index
      %c161 = arith.constant 161 : index
      %41 = vector.load %arg2[%c0_16, %c161] : memref<32x512xf32, #tpu.memory_space<vmem>>, vector<32x1xf32>
      %c0_17 = arith.constant 0 : index
      %c162 = arith.constant 162 : index
      %42 = vector.load %arg2[%c0_17, %c162] : memref<32x512xf32, #tpu.memory_space<vmem>>, vector<32x1xf32>
      %43 = arith.truncf %39 : vector<32x32xf32> to vector<32x32xbf16>
      %44 = arith.truncf %38 : vector<32x512xf32> to vector<32x512xbf16>
      %cst_18 = arith.constant dense<0.000000e+00> : vector<32x512xf32>
      %45 = tpu.matmul %43, %44, %cst_18 {dimension_numbers = #tpu.dot_dimension_numbers<[1], [0], [0], [1], [0, 0, 1, 1], [], []>} : vector<32x32xbf16>, vector<32x512xbf16>, vector<32x512xf32> -> vector<32x512xf32>
      %46 = vector.broadcast %40 : vector<32x1xf32> to vector<32x512xf32>
      %47 = arith.addf %45, %46 : vector<32x512xf32>
      %cst_19 = arith.constant dense<0.000000e+00> : vector<512xf32>
      %48 = vector.multi_reduction <add>, %47, %cst_19 [0] : vector<32x512xf32> to vector<512xf32>
      %49 = vector.shape_cast %48 : vector<512xf32> to vector<1x512xf32>
      %cst_20 = arith.constant 3.125000e-02 : f32
      %50 = vector.broadcast %cst_20 : f32 to vector<1x512xf32>
      %51 = arith.mulf %49, %50 : vector<1x512xf32>
      %52 = vector.broadcast %51 : vector<1x512xf32> to vector<32x512xf32>
      %53 = arith.subf %47, %52 : vector<32x512xf32>
      %54 = arith.mulf %53, %53 : vector<32x512xf32>
      %cst_21 = arith.constant dense<0.000000e+00> : vector<512xf32>
      %55 = vector.multi_reduction <add>, %54, %cst_21 [0] : vector<32x512xf32> to vector<512xf32>
      %56 = vector.shape_cast %55 : vector<512xf32> to vector<1x512xf32>
      %cst_22 = arith.constant 3.125000e-02 : f32
      %57 = vector.broadcast %cst_22 : f32 to vector<1x512xf32>
      %58 = arith.mulf %56, %57 : vector<1x512xf32>
      %cst_23 = arith.constant 9.99999974E-6 : f32
      %59 = vector.broadcast %cst_23 : f32 to vector<1x512xf32>
      %60 = arith.addf %58, %59 : vector<1x512xf32>
      %61 = math.rsqrt %60 : vector<1x512xf32>
      %62 = vector.broadcast %61 : vector<1x512xf32> to vector<32x512xf32>
      %63 = arith.mulf %53, %62 : vector<32x512xf32>
      %64 = vector.broadcast %41 : vector<32x1xf32> to vector<32x512xf32>
      %65 = arith.mulf %63, %64 : vector<32x512xf32>
      %66 = vector.broadcast %42 : vector<32x1xf32> to vector<32x512xf32>
      %67 = arith.addf %65, %66 : vector<32x512xf32>
      %cst_24 = arith.constant 0.000000e+00 : f32
      %68 = vector.broadcast %cst_24 : f32 to vector<32x512xf32>
      %69 = arith.maximumf %67, %68 : vector<32x512xf32>
      %c0_25 = arith.constant 0 : index
      %c256 = arith.constant 256 : index
      %70 = vector.load %arg2[%c0_25, %c256] : memref<32x512xf32, #tpu.memory_space<vmem>>, vector<32x32xf32>
      %c0_26 = arith.constant 0 : index
      %c288 = arith.constant 288 : index
      %71 = vector.load %arg2[%c0_26, %c288] : memref<32x512xf32, #tpu.memory_space<vmem>>, vector<32x1xf32>
      %c0_27 = arith.constant 0 : index
      %c289 = arith.constant 289 : index
      %72 = vector.load %arg2[%c0_27, %c289] : memref<32x512xf32, #tpu.memory_space<vmem>>, vector<32x1xf32>
      %c0_28 = arith.constant 0 : index
      %c290 = arith.constant 290 : index
      %73 = vector.load %arg2[%c0_28, %c290] : memref<32x512xf32, #tpu.memory_space<vmem>>, vector<32x1xf32>
      %74 = arith.truncf %70 : vector<32x32xf32> to vector<32x32xbf16>
      %75 = arith.truncf %69 : vector<32x512xf32> to vector<32x512xbf16>
      %cst_29 = arith.constant dense<0.000000e+00> : vector<32x512xf32>
      %76 = tpu.matmul %74, %75, %cst_29 {dimension_numbers = #tpu.dot_dimension_numbers<[1], [0], [0], [1], [0, 0, 1, 1], [], []>} : vector<32x32xbf16>, vector<32x512xbf16>, vector<32x512xf32> -> vector<32x512xf32>
      %77 = vector.broadcast %71 : vector<32x1xf32> to vector<32x512xf32>
      %78 = arith.addf %76, %77 : vector<32x512xf32>
      %79 = arith.addf %78, %7 : vector<32x512xf32>
      %cst_30 = arith.constant dense<0.000000e+00> : vector<512xf32>
      %80 = vector.multi_reduction <add>, %79, %cst_30 [0] : vector<32x512xf32> to vector<512xf32>
      %81 = vector.shape_cast %80 : vector<512xf32> to vector<1x512xf32>
      %cst_31 = arith.constant 3.125000e-02 : f32
      %82 = vector.broadcast %cst_31 : f32 to vector<1x512xf32>
      %83 = arith.mulf %81, %82 : vector<1x512xf32>
      %84 = vector.broadcast %83 : vector<1x512xf32> to vector<32x512xf32>
      %85 = arith.subf %79, %84 : vector<32x512xf32>
      %86 = arith.mulf %85, %85 : vector<32x512xf32>
      %cst_32 = arith.constant dense<0.000000e+00> : vector<512xf32>
      %87 = vector.multi_reduction <add>, %86, %cst_32 [0] : vector<32x512xf32> to vector<512xf32>
      %88 = vector.shape_cast %87 : vector<512xf32> to vector<1x512xf32>
      %cst_33 = arith.constant 3.125000e-02 : f32
      %89 = vector.broadcast %cst_33 : f32 to vector<1x512xf32>
      %90 = arith.mulf %88, %89 : vector<1x512xf32>
      %cst_34 = arith.constant 9.99999974E-6 : f32
      %91 = vector.broadcast %cst_34 : f32 to vector<1x512xf32>
      %92 = arith.addf %90, %91 : vector<1x512xf32>
      %93 = math.rsqrt %92 : vector<1x512xf32>
      %94 = vector.broadcast %93 : vector<1x512xf32> to vector<32x512xf32>
      %95 = arith.mulf %85, %94 : vector<32x512xf32>
      %96 = vector.broadcast %72 : vector<32x1xf32> to vector<32x512xf32>
      %97 = arith.mulf %95, %96 : vector<32x512xf32>
      %98 = vector.broadcast %73 : vector<32x1xf32> to vector<32x512xf32>
      %99 = arith.addf %97, %98 : vector<32x512xf32>
      %cst_35 = arith.constant 0.000000e+00 : f32
      %100 = vector.broadcast %cst_35 : f32 to vector<32x512xf32>
      %101 = arith.maximumf %99, %100 : vector<32x512xf32>
      %c0_36 = arith.constant 0 : index
      %c384 = arith.constant 384 : index
      %102 = vector.load %arg2[%c0_36, %c384] : memref<32x512xf32, #tpu.memory_space<vmem>>, vector<32x16xf32>
      %c0_37 = arith.constant 0 : index
      %c400 = arith.constant 400 : index
      %103 = vector.load %arg2[%c0_37, %c400] : memref<32x512xf32, #tpu.memory_space<vmem>>, vector<1x16xf32>
      %104 = tpu.transpose %101, [1, 0] : vector<32x512xf32> -> vector<512x32xf32>
      %105 = arith.truncf %104 : vector<512x32xf32> to vector<512x32xbf16>
      %106 = arith.truncf %102 : vector<32x16xf32> to vector<32x16xbf16>
      %cst_38 = arith.constant dense<0.000000e+00> : vector<512x16xf32>
      %107 = tpu.matmul %105, %106, %cst_38 {dimension_numbers = #tpu.dot_dimension_numbers<[1], [0], [0], [1], [0, 0, 1, 1], [], []>} : vector<512x32xbf16>, vector<32x16xbf16>, vector<512x16xf32> -> vector<512x16xf32>
      %108 = vector.broadcast %103 : vector<1x16xf32> to vector<512x16xf32>
      %109 = arith.addf %107, %108 : vector<512x16xf32>
      %110 = arith.index_cast %4 : i32 to index
      %c0_39 = arith.constant 0 : index
      %111 = vector.load %arg3[%110, %c0_39] : memref<1024x16xf32, #tpu.memory_space<vmem>>, vector<512x16xf32>
      tpu.vector_store %arg3[%110, %c0_39], %109 {strides = array<i32>} : memref<1024x16xf32, #tpu.memory_space<vmem>>, vector<512x16xf32>,
    }
    %c2_i32_0 = arith.constant 2 : i32
    return
  }
  func.func @transform_0(%arg0: i32) -> (i32, i32) {
    %c0_i32 = arith.constant 0 : i32
    %c0_i32_0 = arith.constant 0 : i32
    return %arg0, %c0_i32 : i32, i32
  }
  func.func @transform_1(%arg0: i32) -> (i32, i32) {
    %c0_i32 = arith.constant 0 : i32
    %c0_i32_0 = arith.constant 0 : i32
    %c0_i32_1 = arith.constant 0 : i32
    return %c0_i32, %c0_i32_0 : i32, i32
  }
  func.func @transform_2(%arg0: i32) -> (i32, i32) {
    %c0_i32 = arith.constant 0 : i32
    %c0_i32_0 = arith.constant 0 : i32
    return %arg0, %c0_i32 : i32, i32
  }
}

</mosaic_0001>

<llo_original>
// kernel: tpu_custom_call.1
$region0: #{tpu_custom_call.1}
  #allocation0 [shape = 'u32[]', space=smem, size = 0x4, offset = 0x4, fixed_abs, tag = 'smem constant byte address 0x4 - core index']
  #allocation1 [shape = 'u32[144,128]{1,0:T(1,128)}', space=vmem, size = 0x12000, scoped, tag = 'internal scratch']
  %s0 = inlined_call_operand.vmem [shape: f32[2048,32], index: 0, kind: input, shape index: {}]
  %s1 = inlined_call_operand.vmem [shape: f32[32,512], index: 1, kind: input, shape index: {}]
  %s2 = inlined_call_operand.vmem [shape: f32[2048,16], index: 2, kind: output, shape index: {}]
  %s3 = sld [smem:[#allocation0]]
  $region48: #{tpu_custom_call.1} parent=0
    _
  %s5 = ssub.s32 1, %s3
  %s6 = scalar_select 0, %s5, %s3
  loop: start=0, step=1, limit=4
  $region2: #{tpu_custom_call.1} parent=0 // loop_pre_header
    _
  $region3: #{tpu_custom_call.1} parent=0 // loop_header
    %s8 = sphi 0, %s12
    %p9 = scmp.ge.s32.totalorder %s8, 4
    %s18 = sphi 0, %s20
    %s21 = sphi 0, %s18
    %s22 = sphi 0, %s21
    %s38 = sphi 0, %s22
    %s42 = sphi 0, %s42
    %s44 = sphi 0, %s42
    %s45 = sphi 0, %s44
    %s59 = sphi 0, %s45
    %s65 = sphi 0, %s67
    %s68 = sphi 0, %s65
    %s69 = sphi 0, %s68
    %s85 = sphi 0, %s69
  $region4: #{tpu_custom_call.1} parent=0 // loop_header_branch
    %11 = sbr.rel (%p9) target = $region8
  $region5: #{tpu_custom_call.1} parent=0 // loop_body
    %s13 = ssub.s32 %s8, 1
    %s14 = ssub.s32 %s8, 2
    %s15 = sadd.s32 %s8, 1
    %s16 = ssub.s32 %s8, %s15
    %p17 = scmp.eq.s32.totalorder %s16, 0
    %s19 = sadd.s32 %s18, 1
    %s20 = scalar_select %p17, %s18, %s19
    %p23 = pneg %p17
    %p24 = scmp.eq.s32.totalorder %s8, 1
    %p25 = por %p23, %p24
    %p26 = scmp.ne.s32.totalorder %s18, %s21
    %p27 = scmp.eq.s32.totalorder %s8, 0
    %p28 = por %p26, %p27
    %p29 = scmp.ne.s32.totalorder %s18, %s21
    %p30 = scmp.eq.s32.totalorder %s13, 1
    %p31 = por %p29, %p30
    %p32 = scmp.ne.s32.totalorder %s21, %s22
    %p33 = scmp.eq.s32.totalorder %s13, 0
    %p34 = por %p32, %p33
    %p35 = scmp.ne.s32.totalorder %s21, %s22
    %p36 = scmp.eq.s32.totalorder %s14, 1
    %p37 = por %p35, %p36
    %p39 = scmp.ne.s32.totalorder %s22, %s38
    %p40 = scmp.eq.s32.totalorder %s14, 0
    %p41 = por %p39, %p40
    %s43 = sadd.s32 %s42, 1
    %p46 = scmp.eq.s32.totalorder %s8, 1
    %p47 = scmp.ne.s32.totalorder %s42, %s44
    %p48 = scmp.eq.s32.totalorder %s8, 0
    %p49 = por %p47, %p48
    %p50 = scmp.ne.s32.totalorder %s42, %s44
    %p51 = scmp.eq.s32.totalorder %s13, 1
    %p52 = por %p50, %p51
    %p53 = scmp.ne.s32.totalorder %s44, %s45
    %p54 = scmp.eq.s32.totalorder %s13, 0
    %p55 = por %p53, %p54
    %p56 = scmp.ne.s32.totalorder %s44, %s45
    %p57 = scmp.eq.s32.totalorder %s14, 1
    %p58 = por %p56, %p57
    %p60 = scmp.ne.s32.totalorder %s45, %s59
    %p61 = scmp.eq.s32.totalorder %s14, 0
    %p62 = por %p60, %p61
    %s63 = ssub.s32 %s8, %s15
    %p64 = scmp.eq.s32.totalorder %s63, 0
    %s66 = sadd.s32 %s65, 1
    %s67 = scalar_select %p64, %s65, %s66
    %p70 = pneg %p64
    %p71 = scmp.eq.s32.totalorder %s8, 1
    %p72 = por %p70, %p71
    %p73 = scmp.ne.s32.totalorder %s65, %s68
    %p74 = scmp.eq.s32.totalorder %s8, 0
    %p75 = por %p73, %p74
    %p76 = scmp.ne.s32.totalorder %s65, %s68
    %p77 = scmp.eq.s32.totalorder %s13, 1
    %p78 = por %p76, %p77
    %p79 = scmp.ne.s32.totalorder %s68, %s69
    %p80 = scmp.eq.s32.totalorder %s13, 0
    %p81 = por %p79, %p80
    %p82 = scmp.ne.s32.totalorder %s68, %s69
    %p83 = scmp.eq.s32.totalorder %s14, 1
    %p84 = por %p82, %p83
    %p86 = scmp.ne.s32.totalorder %s69, %s85
    %p87 = scmp.eq.s32.totalorder %s14, 0
    %p88 = por %p86, %p87
    %p89 = scmp.le.s32.totalorder 1, %s8
    %p90 = scmp.lt.s32.totalorder %s8, 3
    %p91 = pnand %p89, %p90
    %p92 = pneg %p91
    // Predicated region
    $region9: #{tpu_custom_call.1} parent=5 // pred_check
      _
    $region10: #{tpu_custom_call.1} parent=5 // pred_check_branch
      %94 = sbr.rel (%p91) target = $region12
    $region11: #{tpu_custom_call.1} parent=5 // pred_region
      %s95 = ssub.s32 %s8, 1
      // Predicated region
      $region13: #{tpu_custom_call.1} parent=11 // pred_check
        %p96 = pneg %p55
      $region14: #{tpu_custom_call.1} parent=11 // pred_check_branch
        %98 = sbr.rel (%p96) target = $region16
      $region15: #{tpu_custom_call.1} parent=11 // pred_region
        _
      $region16: #{tpu_custom_call.1} parent=11 // pred_fallthru
        _
    $region12: #{tpu_custom_call.1} parent=5 // pred_fallthru
      _
    %p99 = scmp.lt.s32.totalorder %s8, 2
    // Predicated region
    $region17: #{tpu_custom_call.1} parent=5 // pred_check
      %p100 = pneg %p99
    $region18: #{tpu_custom_call.1} parent=5 // pred_check_branch
      %102 = sbr.rel (%p100) target = $region20
    $region19: #{tpu_custom_call.1} parent=5 // pred_region
      // Predicated region
      $region21: #{tpu_custom_call.1} parent=19 // pred_check
        %p103 = pneg %p28
      $region22: #{tpu_custom_call.1} parent=19 // pred_check_branch
        %105 = sbr.rel (%p103) target = $region24
      $region23: #{tpu_custom_call.1} parent=19 // pred_region
        %s106 = smul.u32 128, %s8
        %p107 = scmp.lt.s32.totalorder %s106, 255
        %s108 = scalar_select %p107, %s106, 255
        %s109 = smul.addr %s108, 8
        %s110 = scalar_lea.vmem %s0, %s109
        %s111 = smul.u32 128, %s8
      $region24: #{tpu_custom_call.1} parent=19 // pred_fallthru
        _
    $region20: #{tpu_custom_call.1} parent=5 // pred_fallthru
      _
    %p112 = scmp.le.s32.totalorder 1, %s8
    %p113 = scmp.lt.s32.totalorder %s8, 3
    %p114 = pnand %p112, %p113
    %p115 = pneg %p114
    // Predicated region
    $region25: #{tpu_custom_call.1} parent=5 // pred_check
      _
    $region26: #{tpu_custom_call.1} parent=5 // pred_check_branch
      %117 = sbr.rel (%p114) target = $region28
    $region27: #{tpu_custom_call.1} parent=5 // pred_region
      %s118 = ssub.s32 %s8, 1
      %s119 = smul.u32 128, %s13
      %p120 = scmp.lt.s32.totalorder %s119, 255
      %s121 = scalar_select %p120, %s119, 255
      %s122 = smul.addr %s121, 8
      %s123 = scalar_lea.vmem %s0, %s122
      %p124 = pneg %p34
      %p125 = pneg %p31
      %p126 = pneg %p55
      %p127 = pneg %p52
      %p128 = pneg %p81
      %p129 = pneg %p78
      %s130 = smul.u32 128, %s13
      %p131 = scmp.lt.s32.totalorder %s130, 255
      %s132 = scalar_select %p131, %s130, 255
      %s133 = smul.addr %s132, 8
      %s134 = scalar_lea.vmem %s2, %s133
      %s135 = smul.u32 128, %s13
      %p136 = scmp.lt.s32.totalorder %s135, 255
      %s137 = scalar_select %p136, %s135, 255
      %s138 = smul.addr %s137, 8
      %s139 = scalar_lea.vmem %s0, %s138
      %s140 = smul.u32 128, %s13
      %s141 = smul.u32 128, %s13
      %p142 = scmp.lt.s32.totalorder %s141, 255
      %s143 = scalar_select %p142, %s141, 255
      %s144 = smul.addr %s143, 8
      %s145 = scalar_lea.vmem %s2, %s144
      %s146 = smul.u32 128, %s13
      loop: start=0, step=1, limit=2
      $region29: #{tpu_custom_call.1} parent=27 // loop_pre_header
        _
      $region30: #{tpu_custom_call.1} parent=27 // loop_header
        %s149 = sphi 0, %s153
        %p150 = scmp.ge.s32.totalorder %s149, 2
      $region31: #{tpu_custom_call.1} parent=27 // loop_header_branch
        %152 = sbr.rel (%p150) target = $region35
      $region32: #{tpu_custom_call.1} parent=27 // loop_body
        %s154 = smul.u32 %s149, 512
        %s155 = scalar_lea.vmem %s139, %s154
        %v156 = vld [vmem:[%s155] sm:$0xff]
        %v157 = vld [vmem:[%s155 + $0x8] sm:$0xff]
        %v158 = vld [vmem:[%s155 + $0x10] sm:$0xff]
        %v159 = vld [vmem:[%s155 + $0x18] sm:$0xff]
        %v160 = vld [vmem:[%s155 + $0x20] sm:$0xff]
        %v161 = vld [vmem:[%s155 + $0x28] sm:$0xff]
        %v162 = vld [vmem:[%s155 + $0x30] sm:$0xff]
        %v163 = vld [vmem:[%s155 + $0x38] sm:$0xff]
        %v164 = vld [vmem:[%s155 + $0x40] sm:$0xff]
        %v165 = vld [vmem:[%s155 + $0x48] sm:$0xff]
        %v166 = vld [vmem:[%s155 + $0x50] sm:$0xff]
        %v167 = vld [vmem:[%s155 + $0x58] sm:$0xff]
        %v168 = vld [vmem:[%s155 + $0x60] sm:$0xff]
        %v169 = vld [vmem:[%s155 + $0x68] sm:$0xff]
        %v170 = vld [vmem:[%s155 + $0x70] sm:$0xff]
        %v171 = vld [vmem:[%s155 + $0x78] sm:$0xff]
        %v172 = vld [vmem:[%s155 + $0x80] sm:$0xff]
        %v173 = vld [vmem:[%s155 + $0x88] sm:$0xff]
        %v174 = vld [vmem:[%s155 + $0x90] sm:$0xff]
        %v175 = vld [vmem:[%s155 + $0x98] sm:$0xff]
        %v176 = vld [vmem:[%s155 + $0xa0] sm:$0xff]
        %v177 = vld [vmem:[%s155 + $0xa8] sm:$0xff]
        %v178 = vld [vmem:[%s155 + $0xb0] sm:$0xff]
        %v179 = vld [vmem:[%s155 + $0xb8] sm:$0xff]
        %v180 = vld [vmem:[%s155 + $0xc0] sm:$0xff]
        %v181 = vld [vmem:[%s155 + $0xc8] sm:$0xff]
        %v182 = vld [vmem:[%s155 + $0xd0] sm:$0xff]
        %v183 = vld [vmem:[%s155 + $0xd8] sm:$0xff]
        %v184 = vld [vmem:[%s155 + $0xe0] sm:$0xff]
        %v185 = vld [vmem:[%s155 + $0xe8] sm:$0xff]
        %v186 = vld [vmem:[%s155 + $0xf0] sm:$0xff]
        %v187 = vld [vmem:[%s155 + $0xf8] sm:$0xff]
        %v188 = vld [vmem:[%s155 + $0x100] sm:$0xff]
        %v189 = vld [vmem:[%s155 + $0x108] sm:$0xff]
        %v190 = vld [vmem:[%s155 + $0x110] sm:$0xff]
        %v191 = vld [vmem:[%s155 + $0x118] sm:$0xff]
        %v192 = vld [vmem:[%s155 + $0x120] sm:$0xff]
        %v193 = vld [vmem:[%s155 + $0x128] sm:$0xff]
        %v194 = vld [vmem:[%s155 + $0x130] sm:$0xff]
        %v195 = vld [vmem:[%s155 + $0x138] sm:$0xff]
        %v196 = vld [vmem:[%s155 + $0x140] sm:$0xff]
        %v197 = vld [vmem:[%s155 + $0x148] sm:$0xff]
        %v198 = vld [vmem:[%s155 + $0x150] sm:$0xff]
        %v199 = vld [vmem:[%s155 + $0x158] sm:$0xff]
        %v200 = vld [vmem:[%s155 + $0x160] sm:$0xff]
        %v201 = vld [vmem:[%s155 + $0x168] sm:$0xff]
        %v202 = vld [vmem:[%s155 + $0x170] sm:$0xff]
        %v203 = vld [vmem:[%s155 + $0x178] sm:$0xff]
        %v204 = vld [vmem:[%s155 + $0x180] sm:$0xff]
        %v205 = vld [vmem:[%s155 + $0x188] sm:$0xff]
        %v206 = vld [vmem:[%s155 + $0x190] sm:$0xff]
        %v207 = vld [vmem:[%s155 + $0x198] sm:$0xff]
        %v208 = vld [vmem:[%s155 + $0x1a0] sm:$0xff]
        %v209 = vld [vmem:[%s155 + $0x1a8] sm:$0xff]
        %v210 = vld [vmem:[%s155 + $0x1b0] sm:$0xff]
        %v211 = vld [vmem:[%s155 + $0x1b8] sm:$0xff]
        %v212 = vld [vmem:[%s155 + $0x1c0] sm:$0xff]
        %v213 = vld [vmem:[%s155 + $0x1c8] sm:$0xff]
        %v214 = vld [vmem:[%s155 + $0x1d0] sm:$0xff]
        %v215 = vld [vmem:[%s155 + $0x1d8] sm:$0xff]
        %v216 = vld [vmem:[%s155 + $0x1e0] sm:$0xff]
        %v217 = vld [vmem:[%s155 + $0x1e8] sm:$0xff]
        %v218 = vld [vmem:[%s155 + $0x1f0] sm:$0xff]
        %v219 = vld [vmem:[%s155 + $0x1f8] sm:$0xff]
        %220 = vxpose.xlu0.b32.start [1/16] %v156, 128
        %221 = vxpose.xlu0.b32.cont [2/16] %v157, 128
        %222 = vxpose.xlu0.b32.cont [3/16] %v158, 128
        %223 = vxpose.xlu0.b32.cont [4/16] %v159, 128
        %224 = vxpose.xlu0.b32.cont [5/16] %v160, 128
        %225 = vxpose.xlu0.b32.cont [6/16] %v161, 128
        %226 = vxpose.xlu0.b32.cont [7/16] %v162, 128
        %227 = vxpose.xlu0.b32.cont [8/16] %v163, 128
        %228 = vxpose.xlu0.b32.cont [9/16] %v164, 128
        %229 = vxpose.xlu0.b32.cont [10/16] %v165, 128
        %230 = vxpose.xlu0.b32.cont [11/16] %v166, 128
        %231 = vxpose.xlu0.b32.cont [12/16] %v167, 128
        %232 = vxpose.xlu0.b32.cont [13/16] %v168, 128
        %233 = vxpose.xlu0.b32.cont [14/16] %v169, 128
        %234 = vxpose.xlu0.b32.cont [15/16] %v170, 128
        %235 = vxpose.xlu0.b32.end [16/16] %v171, 128
        %v236 = vpop.trf.xlu0
        %v237 = vpop.trf.xlu0
        %v238 = vpop.trf.xlu0
        %v239 = vpop.trf.xlu0
        %v240 = vpop.trf.xlu0
        %v241 = vpop.trf.xlu0
        %v242 = vpop.trf.xlu0
        %v243 = vpop.trf.xlu0
        %v244 = vpop.trf.xlu0
        %v245 = vpop.trf.xlu0
        %v246 = vpop.trf.xlu0
        %v247 = vpop.trf.xlu0
        %v248 = vpop.trf.xlu0
        %v249 = vpop.trf.xlu0
        %v250 = vpop.trf.xlu0
        %v251 = vpop.trf.xlu0
        %252 = vxpose.xlu0.b32.start [1/16] %v172, 128
        %253 = vxpose.xlu0.b32.cont [2/16] %v173, 128
        %254 = vxpose.xlu0.b32.cont [3/16] %v174, 128
        %255 = vxpose.xlu0.b32.cont [4/16] %v175, 128
        %256 = vxpose.xlu0.b32.cont [5/16] %v176, 128
        %257 = vxpose.xlu0.b32.cont [6/16] %v177, 128
        %258 = vxpose.xlu0.b32.cont [7/16] %v178, 128
        %259 = vxpose.xlu0.b32.cont [8/16] %v179, 128
        %260 = vxpose.xlu0.b32.cont [9/16] %v180, 128
        %261 = vxpose.xlu0.b32.cont [10/16] %v181, 128
        %262 = vxpose.xlu0.b32.cont [11/16] %v182, 128
        %263 = vxpose.xlu0.b32.cont [12/16] %v183, 128
        %264 = vxpose.xlu0.b32.cont [13/16] %v184, 128
        %265 = vxpose.xlu0.b32.cont [14/16] %v185, 128
        %266 = vxpose.xlu0.b32.cont [15/16] %v186, 128
        %267 = vxpose.xlu0.b32.end [16/16] %v187, 128
        %v268 = vpop.trf.xlu0
        %v269 = vpop.trf.xlu0
        %v270 = vpop.trf.xlu0
        %v271 = vpop.trf.xlu0
        %v272 = vpop.trf.xlu0
        %v273 = vpop.trf.xlu0
        %v274 = vpop.trf.xlu0
        %v275 = vpop.trf.xlu0
        %v276 = vpop.trf.xlu0
        %v277 = vpop.trf.xlu0
        %v278 = vpop.trf.xlu0
        %v279 = vpop.trf.xlu0
        %v280 = vpop.trf.xlu0
        %v281 = vpop.trf.xlu0
        %v282 = vpop.trf.xlu0
        %v283 = vpop.trf.xlu0
        %284 = vxpose.xlu0.b32.start [1/16] %v188, 128
        %285 = vxpose.xlu0.b32.cont [2/16] %v189, 128
        %286 = vxpose.xlu0.b32.cont [3/16] %v190, 128
        %287 = vxpose.xlu0.b32.cont [4/16] %v191, 128
        %288 = vxpose.xlu0.b32.cont [5/16] %v192, 128
        %289 = vxpose.xlu0.b32.cont [6/16] %v193, 128
        %290 = vxpose.xlu0.b32.cont [7/16] %v194, 128
        %291 = vxpose.xlu0.b32.cont [8/16] %v195, 128
        %292 = vxpose.xlu0.b32.cont [9/16] %v196, 128
        %293 = vxpose.xlu0.b32.cont [10/16] %v197, 128
        %294 = vxpose.xlu0.b32.cont [11/16] %v198, 128
        %295 = vxpose.xlu0.b32.cont [12/16] %v199, 128
        %296 = vxpose.xlu0.b32.cont [13/16] %v200, 128
        %297 = vxpose.xlu0.b32.cont [14/16] %v201, 128
        %298 = vxpose.xlu0.b32.cont [15/16] %v202, 128
        %299 = vxpose.xlu0.b32.end [16/16] %v203, 128
        %v300 = vpop.trf.xlu0
        %v301 = vpop.trf.xlu0
        %v302 = vpop.trf.xlu0
        %v303 = vpop.trf.xlu0
        %v304 = vpop.trf.xlu0
        %v305 = vpop.trf.xlu0
        %v306 = vpop.trf.xlu0
        %v307 = vpop.trf.xlu0
        %v308 = vpop.trf.xlu0
        %v309 = vpop.trf.xlu0
        %v310 = vpop.trf.xlu0
        %v311 = vpop.trf.xlu0
        %v312 = vpop.trf.xlu0
        %v313 = vpop.trf.xlu0
        %v314 = vpop.trf.xlu0
        %v315 = vpop.trf.xlu0
        %316 = vxpose.xlu0.b32.start [1/16] %v204, 128
        %317 = vxpose.xlu0.b32.cont [2/16] %v205, 128
        %318 = vxpose.xlu0.b32.cont [3/16] %v206, 128
        %319 = vxpose.xlu0.b32.cont [4/16] %v207, 128
        %320 = vxpose.xlu0.b32.cont [5/16] %v208, 128
        %321 = vxpose.xlu0.b32.cont [6/16] %v209, 128
        %322 = vxpose.xlu0.b32.cont [7/16] %v210, 128
        %323 = vxpose.xlu0.b32.cont [8/16] %v211, 128
        %324 = vxpose.xlu0.b32.cont [9/16] %v212, 128
        %325 = vxpose.xlu0.b32.cont [10/16] %v213, 128
        %326 = vxpose.xlu0.b32.cont [11/16] %v214, 128
        %327 = vxpose.xlu0.b32.cont [12/16] %v215, 128
        %328 = vxpose.xlu0.b32.cont [13/16] %v216, 128
        %329 = vxpose.xlu0.b32.cont [14/16] %v217, 128
        %330 = vxpose.xlu0.b32.cont [15/16] %v218, 128
        %331 = vxpose.xlu0.b32.end [16/16] %v219, 128
        %v332 = vpop.trf.xlu0
        %v333 = vpop.trf.xlu0
        %v334 = vpop.trf.xlu0
        %v335 = vpop.trf.xlu0
        %v336 = vpop.trf.xlu0
        %v337 = vpop.trf.xlu0
        %v338 = vpop.trf.xlu0
        %v339 = vpop.trf.xlu0
        %v340 = vpop.trf.xlu0
        %v341 = vpop.trf.xlu0
        %v342 = vpop.trf.xlu0
        %v343 = vpop.trf.xlu0
        %v344 = vpop.trf.xlu0
        %v345 = vpop.trf.xlu0
        %v346 = vpop.trf.xlu0
        %v347 = vpop.trf.xlu0
        %v348 = vld [vmem:[%s1] sm:$0xff]
        %v349 = vld [vmem:[%s1 + $0x20] sm:$0xff]
        %v350 = vld [vmem:[%s1 + $0x40] sm:$0xff]
        %v351 = vld [vmem:[%s1 + $0x60] sm:$0xff]
        %v352 = vpack.c.bf16 %v349, %v348
        %v353 = vpack.c.bf16 %v351, %v350
        %v354 = vpack.c.bf16 %v237, %v236
        %v355 = vpack.c.bf16 %v269, %v268
        %v356 = vpack.c.bf16 %v301, %v300
        %v357 = vpack.c.bf16 %v333, %v332
        %v358 = vpack.c.bf16 %v239, %v238
        %v359 = vpack.c.bf16 %v271, %v270
        %v360 = vpack.c.bf16 %v303, %v302
        %v361 = vpack.c.bf16 %v335, %v334
        %363 = vset.pattern.permute.xlu0 32
        %364 = vperm.xlu0 %363, %v348
        %v365 = vpop.permute.xlu0 %364
        %368 = vset.pattern.permute.xlu0 32
        %369 = vperm.xlu0 %368, %v349
        %v370 = vpop.permute.xlu0 %369
        %373 = vset.pattern.permute.xlu0 32
        %374 = vperm.xlu0 %373, %v350
        %v375 = vpop.permute.xlu0 %374
        %378 = vset.pattern.permute.xlu0 32
        %379 = vperm.xlu0 %378, %v351
        %v380 = vpop.permute.xlu0 %379
        %vm382 = vcmask 261120
        %v384 = vsel %vm382, %v352, 0
        %v387 = vsel %vm382, %v353, 0
        %389 = vmatprep.subr.bf16.mxu0 %v355
        %390 = vmatpush1.bf16.msra.mxu0 %v354
        %391 = vmatprep.subr.bf16.mxu0 %v359
        %392 = vmatpush1.bf16.msra.mxu0 %v358
        %393 = vmatprep.subr.bf16.mxu0 0
        %394 = vmatpush1.bf16.msra.mxu0 0
        %395 = vmatprep.subr.bf16.mxu0 0
        %396 = vmatpush1.bf16.msra.mxu0 0
        %397 = vmatprep.subr.bf16.mxu0 0
        %398 = vmatpush1.bf16.msra.mxu0 0
        %399 = vmatprep.subr.bf16.mxu0 0
        %400 = vmatpush1.bf16.msra.mxu0 0
        %401 = vmatprep.subr.bf16.mxu0 0
        %402 = vmatpush1.bf16.msra.mxu0 0
        %403 = vmatprep.subr.bf16.mxu0 0
        %404 = vmatpush1.bf16.msra.mxu0 0
        %405 = vmatprep.subr.bf16.mxu0 0
        %406 = vmatpush1.bf16.msra.mxu0 0
        %407 = vmatprep.subr.bf16.mxu0 0
        %408 = vmatpush1.bf16.msra.mxu0 0
        %409 = vmatprep.subr.bf16.mxu0 0
        %410 = vmatpush1.bf16.msra.mxu0 0
        %411 = vmatprep.subr.bf16.mxu0 0
        %412 = vmatpush1.bf16.msra.mxu0 0
        %413 = vmatprep.subr.bf16.mxu0 0
        %414 = vmatpush1.bf16.msra.mxu0 0
        %415 = vmatprep.subr.bf16.mxu0 0
        %416 = vmatpush1.bf16.msra.mxu0 0
        %417 = vmatprep.subr.bf16.mxu0 0
        %418 = vmatpush1.bf16.msra.mxu0 0
        %419 = vmatprep.subr.bf16.mxu0 0
        %420 = vmatpush1.bf16.msra.mxu0 0
        %421 = vmatprep.mubr.bf16.mxu0 0
        %422 = vmatmul.mubr.bf16.gmra.mrb[0].mxu0 %v384
        %v423 = vpop.f32.mrb[0].mxu0
        %v424 = vadd.f32 %v365, %v423
        %v425 = vpop.f32.mrb[0].mxu0
        %v426 = vadd.f32 %v365, %v425
        %v427 = vpop.f32.mrb[0].mxu0
        %v428 = vadd.f32 %v370, %v427
        %v429 = vpop.f32.mrb[0].mxu0
        %v430 = vadd.f32 %v370, %v429
        %431 = vmatprep.mubr.bf16.mxu0 0
        %432 = vmatmul.mubr.bf16.gmra.mrb[0].mxu0 %v387
        %v433 = vpop.f32.mrb[0].mxu0
        %v434 = vadd.f32 %v375, %v433
        %v435 = vpop.f32.mrb[0].mxu0
        %v436 = vadd.f32 %v375, %v435
        %v437 = vpop.f32.mrb[0].mxu0
        %v438 = vadd.f32 %v380, %v437
        %v439 = vpop.f32.mrb[0].mxu0
        %v440 = vadd.f32 %v380, %v439
        %441 = vdwg.mxu0
        %442 = vmatprep.subr.bf16.mxu0 %v357
        %443 = vmatpush1.bf16.msra.mxu0 %v356
        %444 = vmatprep.subr.bf16.mxu0 %v361
        %445 = vmatpush1.bf16.msra.mxu0 %v360
        %446 = vmatprep.subr.bf16.mxu0 0
        %447 = vmatpush1.bf16.msra.mxu0 0
        %448 = vmatprep.subr.bf16.mxu0 0
        %449 = vmatpush1.bf16.msra.mxu0 0
        %450 = vmatprep.subr.bf16.mxu0 0
        %451 = vmatpush1.bf16.msra.mxu0 0
        %452 = vmatprep.subr.bf16.mxu0 0
        %453 = vmatpush1.bf16.msra.mxu0 0
        %454 = vmatprep.subr.bf16.mxu0 0
        %455 = vmatpush1.bf16.msra.mxu0 0
        %456 = vmatprep.subr.bf16.mxu0 0
        %457 = vmatpush1.bf16.msra.mxu0 0
        %458 = vmatprep.subr.bf16.mxu0 0
        %459 = vmatpush1.bf16.msra.mxu0 0
        %460 = vmatprep.subr.bf16.mxu0 0
        %461 = vmatpush1.bf16.msra.mxu0 0
        %462 = vmatprep.subr.bf16.mxu0 0
        %463 = vmatpush1.bf16.msra.mxu0 0
        %464 = vmatprep.subr.bf16.mxu0 0
        %465 = vmatpush1.bf16.msra.mxu0 0
        %466 = vmatprep.subr.bf16.mxu0 0
        %467 = vmatpush1.bf16.msra.mxu0 0
        %468 = vmatprep.subr.bf16.mxu0 0
        %469 = vmatpush1.bf16.msra.mxu0 0
        %470 = vmatprep.subr.bf16.mxu0 0
        %471 = vmatpush1.bf16.msra.mxu0 0
        %472 = vmatprep.subr.bf16.mxu0 0
        %473 = vmatpush1.bf16.msra.mxu0 0
        %474 = vmatprep.mubr.bf16.mxu0 0
        %475 = vmatmul.mubr.bf16.gmra.mrb[0].mxu0 %v384
        %v476 = vpop.f32.mrb[0].mxu0
        %v477 = vadd.f32 %v365, %v476
        %v478 = vpop.f32.mrb[0].mxu0
        %v479 = vadd.f32 %v365, %v478
        %v480 = vpop.f32.mrb[0].mxu0
        %v481 = vadd.f32 %v370, %v480
        %v482 = vpop.f32.mrb[0].mxu0
        %v483 = vadd.f32 %v370, %v482
        %484 = vmatprep.mubr.bf16.mxu0 0
        %485 = vmatmul.mubr.bf16.gmra.mrb[0].mxu0 %v387
        %v486 = vpop.f32.mrb[0].mxu0
        %v487 = vadd.f32 %v375, %v486
        %v488 = vpop.f32.mrb[0].mxu0
        %v489 = vadd.f32 %v375, %v488
        %v490 = vpop.f32.mrb[0].mxu0
        %v491 = vadd.f32 %v380, %v490
        %v492 = vpop.f32.mrb[0].mxu0
        %v493 = vadd.f32 %v380, %v492
        %494 = vdwg.mxu0
        %v495 = vadd.f32 %v424, %v428
        %v496 = vadd.f32 %v495, %v434
        %v497 = vadd.f32 %v496, %v438
        %v498 = vrot.slane %v497, 4
        %v499 = vadd.f32 %v497, %v498
        %v500 = vrot.slane %v499, 2
        %v501 = vadd.f32 %v499, %v500
        %v502 = vrot.slane %v501, 1
        %v503 = vadd.f32 %v501, %v502
        %v504 = vadd.f32 %v426, %v430
        %v505 = vadd.f32 %v504, %v436
        %v506 = vadd.f32 %v505, %v440
        %v507 = vrot.slane %v506, 4
        %v508 = vadd.f32 %v506, %v507
        %v509 = vrot.slane %v508, 2
        %v510 = vadd.f32 %v508, %v509
        %v511 = vrot.slane %v510, 1
        %v512 = vadd.f32 %v510, %v511
        %v513 = vadd.f32 %v477, %v481
        %v514 = vadd.f32 %v513, %v487
        %v515 = vadd.f32 %v514, %v491
        %v516 = vrot.slane %v515, 4
        %v517 = vadd.f32 %v515, %v516
        %v518 = vrot.slane %v517, 2
        %v519 = vadd.f32 %v517, %v518
        %v520 = vrot.slane %v519, 1
        %v521 = vadd.f32 %v519, %v520
        %v522 = vadd.f32 %v479, %v483
        %v523 = vadd.f32 %v522, %v489
        %v524 = vadd.f32 %v523, %v493
        %v525 = vrot.slane %v524, 4
        %v526 = vadd.f32 %v524, %v525
        %v527 = vrot.slane %v526, 2
        %v528 = vadd.f32 %v526, %v527
        %v529 = vrot.slane %v528, 1
        %v530 = vadd.f32 %v528, %v529
        %v531 = vmul.f32 %v503, 0.03125
        %v532 = vmul.f32 %v512, 0.03125
        %v533 = vmul.f32 %v521, 0.03125
        %v534 = vmul.f32 %v530, 0.03125
        %v535 = vsub.f32 %v424, %v531
        %v536 = vsub.f32 %v426, %v532
        %v537 = vsub.f32 %v477, %v533
        %v538 = vsub.f32 %v479, %v534
        %v539 = vsub.f32 %v428, %v531
        %v540 = vsub.f32 %v430, %v532
        %v541 = vsub.f32 %v481, %v533
        %v542 = vsub.f32 %v483, %v534
        %v543 = vsub.f32 %v434, %v531
        %v544 = vsub.f32 %v436, %v532
        %v545 = vsub.f32 %v487, %v533
        %v546 = vsub.f32 %v489, %v534
        %v547 = vsub.f32 %v438, %v531
        %v548 = vsub.f32 %v440, %v532
        %v549 = vsub.f32 %v491, %v533
        %v550 = vsub.f32 %v493, %v534
        %v551 = vmul.f32 %v535, %v535
        %v552 = vmul.f32 %v536, %v536
        %v553 = vmul.f32 %v537, %v537
        %v554 = vmul.f32 %v538, %v538
        %v555 = vmul.f32 %v539, %v539
        %v556 = vmul.f32 %v540, %v540
        %v557 = vmul.f32 %v541, %v541
        %v558 = vmul.f32 %v542, %v542
        %v559 = vmul.f32 %v543, %v543
        %v560 = vmul.f32 %v544, %v544
        %v561 = vmul.f32 %v545, %v545
        %v562 = vmul.f32 %v546, %v546
        %v563 = vmul.f32 %v547, %v547
        %v564 = vmul.f32 %v548, %v548
        %v565 = vmul.f32 %v549, %v549
        %v566 = vmul.f32 %v550, %v550
        %v567 = vadd.f32 %v551, %v555
        %v568 = vadd.f32 %v567, %v559
        %v569 = vadd.f32 %v568, %v563
        %v570 = vrot.slane %v569, 4
        %v571 = vadd.f32 %v569, %v570
        %v572 = vrot.slane %v571, 2
        %v573 = vadd.f32 %v571, %v572
        %v574 = vrot.slane %v573, 1
        %v575 = vadd.f32 %v573, %v574
        %v576 = vadd.f32 %v552, %v556
        %v577 = vadd.f32 %v576, %v560
        %v578 = vadd.f32 %v577, %v564
        %v579 = vrot.slane %v578, 4
        %v580 = vadd.f32 %v578, %v579
        %v581 = vrot.slane %v580, 2
        %v582 = vadd.f32 %v580, %v581
        %v583 = vrot.slane %v582, 1
        %v584 = vadd.f32 %v582, %v583
        %v585 = vadd.f32 %v553, %v557
        %v586 = vadd.f32 %v585, %v561
        %v587 = vadd.f32 %v586, %v565
        %v588 = vrot.slane %v587, 4
        %v589 = vadd.f32 %v587, %v588
        %v590 = vrot.slane %v589, 2
        %v591 = vadd.f32 %v589, %v590
        %v592 = vrot.slane %v591, 1
        %v593 = vadd.f32 %v591, %v592
        %v594 = vadd.f32 %v554, %v558
        %v595 = vadd.f32 %v594, %v562
        %v596 = vadd.f32 %v595, %v566
        %v597 = vrot.slane %v596, 4
        %v598 = vadd.f32 %v596, %v597
        %v599 = vrot.slane %v598, 2
        %v600 = vadd.f32 %v598, %v599
        %v601 = vrot.slane %v600, 1
        %v602 = vadd.f32 %v600, %v601
        %v603 = vmul.f32 %v575, 0.03125
        %v604 = vmul.f32 %v584, 0.03125
        %v605 = vmul.f32 %v593, 0.03125
        %v606 = vmul.f32 %v602, 0.03125
        %v607 = vadd.f32 %v603, 1e-05
        %v608 = vadd.f32 %v604, 1e-05
        %v609 = vadd.f32 %v605, 1e-05
        %v610 = vadd.f32 %v606, 1e-05
        %v611 = vrsqrt.pop %v607
        %v612 = vrsqrt.pop %v608
        %v613 = vrsqrt.pop %v609
        %v614 = vrsqrt.pop %v610
        %v615 = vmul.f32 %v535, %v611
        %v616 = vmul.f32 %v536, %v612
        %v617 = vmul.f32 %v537, %v613
        %v618 = vmul.f32 %v538, %v614
        %v619 = vmul.f32 %v539, %v611
        %v620 = vmul.f32 %v540, %v612
        %v621 = vmul.f32 %v541, %v613
        %v622 = vmul.f32 %v542, %v614
        %v623 = vmul.f32 %v543, %v611
        %v624 = vmul.f32 %v544, %v612
        %v625 = vmul.f32 %v545, %v613
        %v626 = vmul.f32 %v546, %v614
        %v627 = vmul.f32 %v547, %v611
        %v628 = vmul.f32 %v548, %v612
        %v629 = vmul.f32 %v549, %v613
        %v630 = vmul.f32 %v550, %v614
        %631 = vset.pattern.permute.xlu0 33
        %632 = vperm.xlu0 %631, %v348
        %v633 = vpop.permute.xlu0 %632
        %635 = vset.pattern.permute.xlu0 33
        %636 = vperm.xlu0 %635, %v349
        %v637 = vpop.permute.xlu0 %636
        %639 = vset.pattern.permute.xlu0 33
        %640 = vperm.xlu0 %639, %v350
        %v641 = vpop.permute.xlu0 %640
        %643 = vset.pattern.permute.xlu0 33
        %644 = vperm.xlu0 %643, %v351
        %v645 = vpop.permute.xlu0 %644
        %v647 = vmul.f32 %v615, %v633
        %v648 = vmul.f32 %v616, %v633
        %v649 = vmul.f32 %v617, %v633
        %v650 = vmul.f32 %v618, %v633
        %v651 = vmul.f32 %v619, %v637
        %v652 = vmul.f32 %v620, %v637
        %v653 = vmul.f32 %v621, %v637
        %v654 = vmul.f32 %v622, %v637
        %v655 = vmul.f32 %v623, %v641
        %v656 = vmul.f32 %v624, %v641
        %v657 = vmul.f32 %v625, %v641
        %v658 = vmul.f32 %v626, %v641
        %v659 = vmul.f32 %v627, %v645
        %v660 = vmul.f32 %v628, %v645
        %v661 = vmul.f32 %v629, %v645
        %v662 = vmul.f32 %v630, %v645
        %663 = vset.pattern.permute.xlu0 34
        %664 = vperm.xlu0 %663, %v348
        %v665 = vpop.permute.xlu0 %664
        %667 = vset.pattern.permute.xlu0 34
        %668 = vperm.xlu0 %667, %v349
        %v669 = vpop.permute.xlu0 %668
        %671 = vset.pattern.permute.xlu0 34
        %672 = vperm.xlu0 %671, %v350
        %v673 = vpop.permute.xlu0 %672
        %675 = vset.pattern.permute.xlu0 34
        %676 = vperm.xlu0 %675, %v351
        %v677 = vpop.permute.xlu0 %676
        %v679 = vadd.f32 %v647, %v665
        %v680 = vadd.f32 %v648, %v665
        %v681 = vadd.f32 %v649, %v665
        %v682 = vadd.f32 %v650, %v665
        %v683 = vadd.f32 %v651, %v669
        %v684 = vadd.f32 %v652, %v669
        %v685 = vadd.f32 %v653, %v669
        %v686 = vadd.f32 %v654, %v669
        %v687 = vadd.f32 %v655, %v673
        %v688 = vadd.f32 %v656, %v673
        %v689 = vadd.f32 %v657, %v673
        %v690 = vadd.f32 %v658, %v673
        %v691 = vadd.f32 %v659, %v677
        %v692 = vadd.f32 %v660, %v677
        %v693 = vadd.f32 %v661, %v677
        %v694 = vadd.f32 %v662, %v677
        %v695 = vmax.f32 %v679, 0.0
        %v696 = vmax.f32 %v680, 0.0
        %v697 = vmax.f32 %v681, 0.0
        %v698 = vmax.f32 %v682, 0.0
        %v699 = vmax.f32 %v683, 0.0
        %v700 = vmax.f32 %v684, 0.0
        %v701 = vmax.f32 %v685, 0.0
        %v702 = vmax.f32 %v686, 0.0
        %v703 = vmax.f32 %v687, 0.0
        %v704 = vmax.f32 %v688, 0.0
        %v705 = vmax.f32 %v689, 0.0
        %v706 = vmax.f32 %v690, 0.0
        %v707 = vmax.f32 %v691, 0.0
        %v708 = vmax.f32 %v692, 0.0
        %v709 = vmax.f32 %v693, 0.0
        %v710 = vmax.f32 %v694, 0.0
        %v711 = vld [vmem:[%s1 + $0x8] sm:$0xff]
        %v712 = vld [vmem:[%s1 + $0x28] sm:$0xff]
        %v713 = vld [vmem:[%s1 + $0x48] sm:$0xff]
        %v714 = vld [vmem:[%s1 + $0x68] sm:$0xff]
        %v715 = vpack.c.bf16 %v712, %v711
        %v716 = vpack.c.bf16 %v714, %v713
        %v717 = vpack.c.bf16 %v699, %v695
        %v718 = vpack.c.bf16 %v700, %v696
        %v719 = vpack.c.bf16 %v701, %v697
        %v720 = vpack.c.bf16 %v702, %v698
        %v721 = vpack.c.bf16 %v707, %v703
        %v722 = vpack.c.bf16 %v708, %v704
        %v723 = vpack.c.bf16 %v709, %v705
        %v724 = vpack.c.bf16 %v710, %v706
        %726 = vset.pattern.permute.xlu0 32
        %727 = vperm.xlu0 %726, %v711
        %v728 = vpop.permute.xlu0 %727
        %731 = vset.pattern.permute.xlu0 32
        %732 = vperm.xlu0 %731, %v712
        %v733 = vpop.permute.xlu0 %732
        %736 = vset.pattern.permute.xlu0 32
        %737 = vperm.xlu0 %736, %v713
        %v738 = vpop.permute.xlu0 %737
        %741 = vset.pattern.permute.xlu0 32
        %742 = vperm.xlu0 %741, %v714
        %v743 = vpop.permute.xlu0 %742
        %v746 = vsel %vm382, %v715, 0
        %v749 = vsel %vm382, %v716, 0
        %751 = vmatprep.subr.bf16.mxu0 %v718
        %752 = vmatpush1.bf16.msra.mxu0 %v717
        %753 = vmatprep.subr.bf16.mxu0 %v722
        %754 = vmatpush1.bf16.msra.mxu0 %v721
        %755 = vmatprep.subr.bf16.mxu0 0
        %756 = vmatpush1.bf16.msra.mxu0 0
        %757 = vmatprep.subr.bf16.mxu0 0
        %758 = vmatpush1.bf16.msra.mxu0 0
        %759 = vmatprep.subr.bf16.mxu0 0
        %760 = vmatpush1.bf16.msra.mxu0 0
        %761 = vmatprep.subr.bf16.mxu0 0
        %762 = vmatpush1.bf16.msra.mxu0 0
        %763 = vmatprep.subr.bf16.mxu0 0
        %764 = vmatpush1.bf16.msra.mxu0 0
        %765 = vmatprep.subr.bf16.mxu0 0
        %766 = vmatpush1.bf16.msra.mxu0 0
        %767 = vmatprep.subr.bf16.mxu0 0
        %768 = vmatpush1.bf16.msra.mxu0 0
        %769 = vmatprep.subr.bf16.mxu0 0
        %770 = vmatpush1.bf16.msra.mxu0 0
        %771 = vmatprep.subr.bf16.mxu0 0
        %772 = vmatpush1.bf16.msra.mxu0 0
        %773 = vmatprep.subr.bf16.mxu0 0
        %774 = vmatpush1.bf16.msra.mxu0 0
        %775 = vmatprep.subr.bf16.mxu0 0
        %776 = vmatpush1.bf16.msra.mxu0 0
        %777 = vmatprep.subr.bf16.mxu0 0
        %778 = vmatpush1.bf16.msra.mxu0 0
        %779 = vmatprep.subr.bf16.mxu0 0
        %780 = vmatpush1.bf16.msra.mxu0 0
        %781 = vmatprep.subr.bf16.mxu0 0
        %782 = vmatpush1.bf16.msra.mxu0 0
        %783 = vmatprep.mubr.bf16.mxu0 0
        %784 = vmatmul.mubr.bf16.gmra.mrb[0].mxu0 %v746
        %v785 = vpop.f32.mrb[0].mxu0
        %v786 = vadd.f32 %v728, %v785
        %v787 = vpop.f32.mrb[0].mxu0
        %v788 = vadd.f32 %v728, %v787
        %v789 = vpop.f32.mrb[0].mxu0
        %v790 = vadd.f32 %v733, %v789
        %v791 = vpop.f32.mrb[0].mxu0
        %v792 = vadd.f32 %v733, %v791
        %793 = vmatprep.mubr.bf16.mxu0 0
        %794 = vmatmul.mubr.bf16.gmra.mrb[0].mxu0 %v749
        %v795 = vpop.f32.mrb[0].mxu0
        %v796 = vadd.f32 %v738, %v795
        %v797 = vpop.f32.mrb[0].mxu0
        %v798 = vadd.f32 %v738, %v797
        %v799 = vpop.f32.mrb[0].mxu0
        %v800 = vadd.f32 %v743, %v799
        %v801 = vpop.f32.mrb[0].mxu0
        %v802 = vadd.f32 %v743, %v801
        %803 = vdwg.mxu0
        %804 = vmatprep.subr.bf16.mxu0 %v720
        %805 = vmatpush1.bf16.msra.mxu0 %v719
        %806 = vmatprep.subr.bf16.mxu0 %v724
        %807 = vmatpush1.bf16.msra.mxu0 %v723
        %808 = vmatprep.subr.bf16.mxu0 0
        %809 = vmatpush1.bf16.msra.mxu0 0
        %810 = vmatprep.subr.bf16.mxu0 0
        %811 = vmatpush1.bf16.msra.mxu0 0
        %812 = vmatprep.subr.bf16.mxu0 0
        %813 = vmatpush1.bf16.msra.mxu0 0
        %814 = vmatprep.subr.bf16.mxu0 0
        %815 = vmatpush1.bf16.msra.mxu0 0
        %816 = vmatprep.subr.bf16.mxu0 0
        %817 = vmatpush1.bf16.msra.mxu0 0
        %818 = vmatprep.subr.bf16.mxu0 0
        %819 = vmatpush1.bf16.msra.mxu0 0
        %820 = vmatprep.subr.bf16.mxu0 0
        %821 = vmatpush1.bf16.msra.mxu0 0
        %822 = vmatprep.subr.bf16.mxu0 0
        %823 = vmatpush1.bf16.msra.mxu0 0
        %824 = vmatprep.subr.bf16.mxu0 0
        %825 = vmatpush1.bf16.msra.mxu0 0
        %826 = vmatprep.subr.bf16.mxu0 0
        %827 = vmatpush1.bf16.msra.mxu0 0
        %828 = vmatprep.subr.bf16.mxu0 0
        %829 = vmatpush1.bf16.msra.mxu0 0
        %830 = vmatprep.subr.bf16.mxu0 0
        %831 = vmatpush1.bf16.msra.mxu0 0
        %832 = vmatprep.subr.bf16.mxu0 0
        %833 = vmatpush1.bf16.msra.mxu0 0
        %834 = vmatprep.subr.bf16.mxu0 0
        %835 = vmatpush1.bf16.msra.mxu0 0
        %836 = vmatprep.mubr.bf16.mxu0 0
        %837 = vmatmul.mubr.bf16.gmra.mrb[0].mxu0 %v746
        %v838 = vpop.f32.mrb[0].mxu0
        %v839 = vadd.f32 %v728, %v838
        %v840 = vpop.f32.mrb[0].mxu0
        %v841 = vadd.f32 %v728, %v840
        %v842 = vpop.f32.mrb[0].mxu0
        %v843 = vadd.f32 %v733, %v842
        %v844 = vpop.f32.mrb[0].mxu0
        %v845 = vadd.f32 %v733, %v844
        %846 = vmatprep.mubr.bf16.mxu0 0
        %847 = vmatmul.mubr.bf16.gmra.mrb[0].mxu0 %v749
        %v848 = vpop.f32.mrb[0].mxu0
        %v849 = vadd.f32 %v738, %v848
        %v850 = vpop.f32.mrb[0].mxu0
        %v851 = vadd.f32 %v738, %v850
        %v852 = vpop.f32.mrb[0].mxu0
        %v853 = vadd.f32 %v743, %v852
        %v854 = vpop.f32.mrb[0].mxu0
        %v855 = vadd.f32 %v743, %v854
        %856 = vdwg.mxu0
        %v857 = vadd.f32 %v786, %v790
        %v858 = vadd.f32 %v857, %v796
        %v859 = vadd.f32 %v858, %v800
        %v860 = vrot.slane %v859, 4
        %v861 = vadd.f32 %v859, %v860
        %v862 = vrot.slane %v861, 2
        %v863 = vadd.f32 %v861, %v862
        %v864 = vrot.slane %v863, 1
        %v865 = vadd.f32 %v863, %v864
        %v866 = vadd.f32 %v788, %v792
        %v867 = vadd.f32 %v866, %v798
        %v868 = vadd.f32 %v867, %v802
        %v869 = vrot.slane %v868, 4
        %v870 = vadd.f32 %v868, %v869
        %v871 = vrot.slane %v870, 2
        %v872 = vadd.f32 %v870, %v871
        %v873 = vrot.slane %v872, 1
        %v874 = vadd.f32 %v872, %v873
        %v875 = vadd.f32 %v839, %v843
        %v876 = vadd.f32 %v875, %v849
        %v877 = vadd.f32 %v876, %v853
        %v878 = vrot.slane %v877, 4
        %v879 = vadd.f32 %v877, %v878
        %v880 = vrot.slane %v879, 2
        %v881 = vadd.f32 %v879, %v880
        %v882 = vrot.slane %v881, 1
        %v883 = vadd.f32 %v881, %v882
        %v884 = vadd.f32 %v841, %v845
        %v885 = vadd.f32 %v884, %v851
        %v886 = vadd.f32 %v885, %v855
        %v887 = vrot.slane %v886, 4
        %v888 = vadd.f32 %v886, %v887
        %v889 = vrot.slane %v888, 2
        %v890 = vadd.f32 %v888, %v889
        %v891 = vrot.slane %v890, 1
        %v892 = vadd.f32 %v890, %v891
        %v893 = vmul.f32 %v865, 0.03125
        %v894 = vmul.f32 %v874, 0.03125
        %v895 = vmul.f32 %v883, 0.03125
        %v896 = vmul.f32 %v892, 0.03125
        %v897 = vsub.f32 %v786, %v893
        %v898 = vsub.f32 %v788, %v894
        %v899 = vsub.f32 %v839, %v895
        %v900 = vsub.f32 %v841, %v896
        %v901 = vsub.f32 %v790, %v893
        %v902 = vsub.f32 %v792, %v894
        %v903 = vsub.f32 %v843, %v895
        %v904 = vsub.f32 %v845, %v896
        %v905 = vsub.f32 %v796, %v893
        %v906 = vsub.f32 %v798, %v894
        %v907 = vsub.f32 %v849, %v895
        %v908 = vsub.f32 %v851, %v896
        %v909 = vsub.f32 %v800, %v893
        %v910 = vsub.f32 %v802, %v894
        %v911 = vsub.f32 %v853, %v895
        %v912 = vsub.f32 %v855, %v896
        %v913 = vmul.f32 %v897, %v897
        %v914 = vmul.f32 %v898, %v898
        %v915 = vmul.f32 %v899, %v899
        %v916 = vmul.f32 %v900, %v900
        %v917 = vmul.f32 %v901, %v901
        %v918 = vmul.f32 %v902, %v902
        %v919 = vmul.f32 %v903, %v903
        %v920 = vmul.f32 %v904, %v904
        %v921 = vmul.f32 %v905, %v905
        %v922 = vmul.f32 %v906, %v906
        %v923 = vmul.f32 %v907, %v907
        %v924 = vmul.f32 %v908, %v908
        %v925 = vmul.f32 %v909, %v909
        %v926 = vmul.f32 %v910, %v910
        %v927 = vmul.f32 %v911, %v911
        %v928 = vmul.f32 %v912, %v912
        %v929 = vadd.f32 %v913, %v917
        %v930 = vadd.f32 %v929, %v921
        %v931 = vadd.f32 %v930, %v925
        %v932 = vrot.slane %v931, 4
        %v933 = vadd.f32 %v931, %v932
        %v934 = vrot.slane %v933, 2
        %v935 = vadd.f32 %v933, %v934
        %v936 = vrot.slane %v935, 1
        %v937 = vadd.f32 %v935, %v936
        %v938 = vadd.f32 %v914, %v918
        %v939 = vadd.f32 %v938, %v922
        %v940 = vadd.f32 %v939, %v926
        %v941 = vrot.slane %v940, 4
        %v942 = vadd.f32 %v940, %v941
        %v943 = vrot.slane %v942, 2
        %v944 = vadd.f32 %v942, %v943
        %v945 = vrot.slane %v944, 1
        %v946 = vadd.f32 %v944, %v945
        %v947 = vadd.f32 %v915, %v919
        %v948 = vadd.f32 %v947, %v923
        %v949 = vadd.f32 %v948, %v927
        %v950 = vrot.slane %v949, 4
        %v951 = vadd.f32 %v949, %v950
        %v952 = vrot.slane %v951, 2
        %v953 = vadd.f32 %v951, %v952
        %v954 = vrot.slane %v953, 1
        %v955 = vadd.f32 %v953, %v954
        %v956 = vadd.f32 %v916, %v920
        %v957 = vadd.f32 %v956, %v924
        %v958 = vadd.f32 %v957, %v928
        %v959 = vrot.slane %v958, 4
        %v960 = vadd.f32 %v958, %v959
        %v961 = vrot.slane %v960, 2
        %v962 = vadd.f32 %v960, %v961
        %v963 = vrot.slane %v962, 1
        %v964 = vadd.f32 %v962, %v963
        %v965 = vmul.f32 %v937, 0.03125
        %v966 = vmul.f32 %v946, 0.03125
        %v967 = vmul.f32 %v955, 0.03125
        %v968 = vmul.f32 %v964, 0.03125
        %v969 = vadd.f32 %v965, 1e-05
        %v970 = vadd.f32 %v966, 1e-05
        %v971 = vadd.f32 %v967, 1e-05
        %v972 = vadd.f32 %v968, 1e-05
        %v973 = vrsqrt.pop %v969
        %v974 = vrsqrt.pop %v970
        %v975 = vrsqrt.pop %v971
        %v976 = vrsqrt.pop %v972
        %v977 = vmul.f32 %v897, %v973
        %v978 = vmul.f32 %v898, %v974
        %v979 = vmul.f32 %v899, %v975
        %v980 = vmul.f32 %v900, %v976
        %v981 = vmul.f32 %v901, %v973
        %v982 = vmul.f32 %v902, %v974
        %v983 = vmul.f32 %v903, %v975
        %v984 = vmul.f32 %v904, %v976
        %v985 = vmul.f32 %v905, %v973
        %v986 = vmul.f32 %v906, %v974
        %v987 = vmul.f32 %v907, %v975
        %v988 = vmul.f32 %v908, %v976
        %v989 = vmul.f32 %v909, %v973
        %v990 = vmul.f32 %v910, %v974
        %v991 = vmul.f32 %v911, %v975
        %v992 = vmul.f32 %v912, %v976
        %993 = vset.pattern.permute.xlu0 33
        %994 = vperm.xlu0 %993, %v711
        %v995 = vpop.permute.xlu0 %994
        %997 = vset.pattern.permute.xlu0 33
        %998 = vperm.xlu0 %997, %v712
        %v999 = vpop.permute.xlu0 %998
        %1001 = vset.pattern.permute.xlu0 33
        %1002 = vperm.xlu0 %1001, %v713
        %v1003 = vpop.permute.xlu0 %1002
        %1005 = vset.pattern.permute.xlu0 33
        %1006 = vperm.xlu0 %1005, %v714
        %v1007 = vpop.permute.xlu0 %1006
        %v1009 = vmul.f32 %v977, %v995
        %v1010 = vmul.f32 %v978, %v995
        %v1011 = vmul.f32 %v979, %v995
        %v1012 = vmul.f32 %v980, %v995
        %v1013 = vmul.f32 %v981, %v999
        %v1014 = vmul.f32 %v982, %v999
        %v1015 = vmul.f32 %v983, %v999
        %v1016 = vmul.f32 %v984, %v999
        %v1017 = vmul.f32 %v985, %v1003
        %v1018 = vmul.f32 %v986, %v1003
        %v1019 = vmul.f32 %v987, %v1003
        %v1020 = vmul.f32 %v988, %v1003
        %v1021 = vmul.f32 %v989, %v1007
        %v1022 = vmul.f32 %v990, %v1007
        %v1023 = vmul.f32 %v991, %v1007
        %v1024 = vmul.f32 %v992, %v1007
        %1025 = vset.pattern.permute.xlu0 34
        %1026 = vperm.xlu0 %1025, %v711
        %v1027 = vpop.permute.xlu0 %1026
        %1029 = vset.pattern.permute.xlu0 34
        %1030 = vperm.xlu0 %1029, %v712
        %v1031 = vpop.permute.xlu0 %1030
        %1033 = vset.pattern.permute.xlu0 34
        %1034 = vperm.xlu0 %1033, %v713
        %v1035 = vpop.permute.xlu0 %1034
        %1037 = vset.pattern.permute.xlu0 34
        %1038 = vperm.xlu0 %1037, %v714
        %v1039 = vpop.permute.xlu0 %1038
        %v1041 = vadd.f32 %v1009, %v1027
        %v1042 = vadd.f32 %v1010, %v1027
        %v1043 = vadd.f32 %v1011, %v1027
        %v1044 = vadd.f32 %v1012, %v1027
        %v1045 = vadd.f32 %v1013, %v1031
        %v1046 = vadd.f32 %v1014, %v1031
        %v1047 = vadd.f32 %v1015, %v1031
        %v1048 = vadd.f32 %v1016, %v1031
        %v1049 = vadd.f32 %v1017, %v1035
        %v1050 = vadd.f32 %v1018, %v1035
        %v1051 = vadd.f32 %v1019, %v1035
        %v1052 = vadd.f32 %v1020, %v1035
        %v1053 = vadd.f32 %v1021, %v1039
        %v1054 = vadd.f32 %v1022, %v1039
        %v1055 = vadd.f32 %v1023, %v1039
        %v1056 = vadd.f32 %v1024, %v1039
        %v1057 = vmax.f32 %v1041, 0.0
        %v1058 = vmax.f32 %v1042, 0.0
        %v1059 = vmax.f32 %v1043, 0.0
        %v1060 = vmax.f32 %v1044, 0.0
        %v1061 = vmax.f32 %v1045, 0.0
        %v1062 = vmax.f32 %v1046, 0.0
        %v1063 = vmax.f32 %v1047, 0.0
        %v1064 = vmax.f32 %v1048, 0.0
        %v1065 = vmax.f32 %v1049, 0.0
        %v1066 = vmax.f32 %v1050, 0.0
        %v1067 = vmax.f32 %v1051, 0.0
        %v1068 = vmax.f32 %v1052, 0.0
        %v1069 = vmax.f32 %v1053, 0.0
        %v1070 = vmax.f32 %v1054, 0.0
        %v1071 = vmax.f32 %v1055, 0.0
        %v1072 = vmax.f32 %v1056, 0.0
        %v1073 = vld [vmem:[%s1 + $0x10] sm:$0xff]
        %v1074 = vld [vmem:[%s1 + $0x30] sm:$0xff]
        %v1075 = vld [vmem:[%s1 + $0x50] sm:$0xff]
        %v1076 = vld [vmem:[%s1 + $0x70] sm:$0xff]
        %v1077 = vpack.c.bf16 %v1074, %v1073
        %v1078 = vpack.c.bf16 %v1076, %v1075
        %v1079 = vpack.c.bf16 %v1061, %v1057
        %v1080 = vpack.c.bf16 %v1062, %v1058
        %v1081 = vpack.c.bf16 %v1063, %v1059
        %v1082 = vpack.c.bf16 %v1064, %v1060
        %v1083 = vpack.c.bf16 %v1069, %v1065
        %v1084 = vpack.c.bf16 %v1070, %v1066
        %v1085 = vpack.c.bf16 %v1071, %v1067
        %v1086 = vpack.c.bf16 %v1072, %v1068
        %1088 = vset.pattern.permute.xlu0 32
        %1089 = vperm.xlu0 %1088, %v1073
        %v1090 = vpop.permute.xlu0 %1089
        %1093 = vset.pattern.permute.xlu0 32
        %1094 = vperm.xlu0 %1093, %v1074
        %v1095 = vpop.permute.xlu0 %1094
        %1098 = vset.pattern.permute.xlu0 32
        %1099 = vperm.xlu0 %1098, %v1075
        %v1100 = vpop.permute.xlu0 %1099
        %1103 = vset.pattern.permute.xlu0 32
        %1104 = vperm.xlu0 %1103, %v1076
        %v1105 = vpop.permute.xlu0 %1104
        %v1108 = vsel %vm382, %v1077, 0
        %v1111 = vsel %vm382, %v1078, 0
        %1113 = vmatprep.subr.bf16.mxu0 %v1080
        %1114 = vmatpush1.bf16.msra.mxu0 %v1079
        %1115 = vmatprep.subr.bf16.mxu0 %v1084
        %1116 = vmatpush1.bf16.msra.mxu0 %v1083
        %1117 = vmatprep.subr.bf16.mxu0 0
        %1118 = vmatpush1.bf16.msra.mxu0 0
        %1119 = vmatprep.subr.bf16.mxu0 0
        %1120 = vmatpush1.bf16.msra.mxu0 0
        %1121 = vmatprep.subr.bf16.mxu0 0
        %1122 = vmatpush1.bf16.msra.mxu0 0
        %1123 = vmatprep.subr.bf16.mxu0 0
        %1124 = vmatpush1.bf16.msra.mxu0 0
        %1125 = vmatprep.subr.bf16.mxu0 0
        %1126 = vmatpush1.bf16.msra.mxu0 0
        %1127 = vmatprep.subr.bf16.mxu0 0
        %1128 = vmatpush1.bf16.msra.mxu0 0
        %1129 = vmatprep.subr.bf16.mxu0 0
        %1130 = vmatpush1.bf16.msra.mxu0 0
        %1131 = vmatprep.subr.bf16.mxu0 0
        %1132 = vmatpush1.bf16.msra.mxu0 0
        %1133 = vmatprep.subr.bf16.mxu0 0
        %1134 = vmatpush1.bf16.msra.mxu0 0
        %1135 = vmatprep.subr.bf16.mxu0 0
        %1136 = vmatpush1.bf16.msra.mxu0 0
        %1137 = vmatprep.subr.bf16.mxu0 0
        %1138 = vmatpush1.bf16.msra.mxu0 0
        %1139 = vmatprep.subr.bf16.mxu0 0
        %1140 = vmatpush1.bf16.msra.mxu0 0
        %1141 = vmatprep.subr.bf16.mxu0 0
        %1142 = vmatpush1.bf16.msra.mxu0 0
        %1143 = vmatprep.subr.bf16.mxu0 0
        %1144 = vmatpush1.bf16.msra.mxu0 0
        %1145 = vmatprep.mubr.bf16.mxu0 0
        %1146 = vmatmul.mubr.bf16.gmra.mrb[0].mxu0 %v1108
        %v1147 = vpop.f32.mrb[0].mxu0
        %v1148 = vadd.f32 %v1090, %v1147
        %v1149 = vpop.f32.mrb[0].mxu0
        %v1150 = vadd.f32 %v1090, %v1149
        %v1151 = vpop.f32.mrb[0].mxu0
        %v1152 = vadd.f32 %v1095, %v1151
        %v1153 = vpop.f32.mrb[0].mxu0
        %v1154 = vadd.f32 %v1095, %v1153
        %1155 = vmatprep.mubr.bf16.mxu0 0
        %1156 = vmatmul.mubr.bf16.gmra.mrb[0].mxu0 %v1111
        %v1157 = vpop.f32.mrb[0].mxu0
        %v1158 = vadd.f32 %v1100, %v1157
        %v1159 = vpop.f32.mrb[0].mxu0
        %v1160 = vadd.f32 %v1100, %v1159
        %v1161 = vpop.f32.mrb[0].mxu0
        %v1162 = vadd.f32 %v1105, %v1161
        %v1163 = vpop.f32.mrb[0].mxu0
        %v1164 = vadd.f32 %v1105, %v1163
        %1165 = vdwg.mxu0
        %1166 = vmatprep.subr.bf16.mxu0 %v1082
        %1167 = vmatpush1.bf16.msra.mxu0 %v1081
        %1168 = vmatprep.subr.bf16.mxu0 %v1086
        %1169 = vmatpush1.bf16.msra.mxu0 %v1085
        %1170 = vmatprep.subr.bf16.mxu0 0
        %1171 = vmatpush1.bf16.msra.mxu0 0
        %1172 = vmatprep.subr.bf16.mxu0 0
        %1173 = vmatpush1.bf16.msra.mxu0 0
        %1174 = vmatprep.subr.bf16.mxu0 0
        %1175 = vmatpush1.bf16.msra.mxu0 0
        %1176 = vmatprep.subr.bf16.mxu0 0
        %1177 = vmatpush1.bf16.msra.mxu0 0
        %1178 = vmatprep.subr.bf16.mxu0 0
        %1179 = vmatpush1.bf16.msra.mxu0 0
        %1180 = vmatprep.subr.bf16.mxu0 0
        %1181 = vmatpush1.bf16.msra.mxu0 0
        %1182 = vmatprep.subr.bf16.mxu0 0
        %1183 = vmatpush1.bf16.msra.mxu0 0
        %1184 = vmatprep.subr.bf16.mxu0 0
        %1185 = vmatpush1.bf16.msra.mxu0 0
        %1186 = vmatprep.subr.bf16.mxu0 0
        %1187 = vmatpush1.bf16.msra.mxu0 0
        %1188 = vmatprep.subr.bf16.mxu0 0
        %1189 = vmatpush1.bf16.msra.mxu0 0
        %1190 = vmatprep.subr.bf16.mxu0 0
        %1191 = vmatpush1.bf16.msra.mxu0 0
        %1192 = vmatprep.subr.bf16.mxu0 0
        %1193 = vmatpush1.bf16.msra.mxu0 0
        %1194 = vmatprep.subr.bf16.mxu0 0
        %1195 = vmatpush1.bf16.msra.mxu0 0
        %1196 = vmatprep.subr.bf16.mxu0 0
        %1197 = vmatpush1.bf16.msra.mxu0 0
        %1198 = vmatprep.mubr.bf16.mxu0 0
        %1199 = vmatmul.mubr.bf16.gmra.mrb[0].mxu0 %v1108
        %v1200 = vpop.f32.mrb[0].mxu0
        %v1201 = vadd.f32 %v1090, %v1200
        %v1202 = vpop.f32.mrb[0].mxu0
        %v1203 = vadd.f32 %v1090, %v1202
        %v1204 = vpop.f32.mrb[0].mxu0
        %v1205 = vadd.f32 %v1095, %v1204
        %v1206 = vpop.f32.mrb[0].mxu0
        %v1207 = vadd.f32 %v1095, %v1206
        %1208 = vmatprep.mubr.bf16.mxu0 0
        %1209 = vmatmul.mubr.bf16.gmra.mrb[0].mxu0 %v1111
        %v1210 = vpop.f32.mrb[0].mxu0
        %v1211 = vadd.f32 %v1100, %v1210
        %v1212 = vpop.f32.mrb[0].mxu0
        %v1213 = vadd.f32 %v1100, %v1212
        %v1214 = vpop.f32.mrb[0].mxu0
        %v1215 = vadd.f32 %v1105, %v1214
        %v1216 = vpop.f32.mrb[0].mxu0
        %v1217 = vadd.f32 %v1105, %v1216
        %1218 = vdwg.mxu0
        %v1219 = vadd.f32 %v1148, %v236
        %v1220 = vadd.f32 %v1150, %v268
        %v1221 = vadd.f32 %v1201, %v300
        %v1222 = vadd.f32 %v1203, %v332
        %v1223 = vadd.f32 %v1152, %v237
        %v1224 = vadd.f32 %v1154, %v269
        %v1225 = vadd.f32 %v1205, %v301
        %v1226 = vadd.f32 %v1207, %v333
        %v1227 = vadd.f32 %v1158, %v238
        %v1228 = vadd.f32 %v1160, %v270
        %v1229 = vadd.f32 %v1211, %v302
        %v1230 = vadd.f32 %v1213, %v334
        %v1231 = vadd.f32 %v1162, %v239
        %v1232 = vadd.f32 %v1164, %v271
        %v1233 = vadd.f32 %v1215, %v303
        %v1234 = vadd.f32 %v1217, %v335
        %v1235 = vadd.f32 %v1219, %v1223
        %v1236 = vadd.f32 %v1235, %v1227
        %v1237 = vadd.f32 %v1236, %v1231
        %v1238 = vrot.slane %v1237, 4
        %v1239 = vadd.f32 %v1237, %v1238
        %v1240 = vrot.slane %v1239, 2
        %v1241 = vadd.f32 %v1239, %v1240
        %v1242 = vrot.slane %v1241, 1
        %v1243 = vadd.f32 %v1241, %v1242
        %v1244 = vadd.f32 %v1220, %v1224
        %v1245 = vadd.f32 %v1244, %v1228
        %v1246 = vadd.f32 %v1245, %v1232
        %v1247 = vrot.slane %v1246, 4
        %v1248 = vadd.f32 %v1246, %v1247
        %v1249 = vrot.slane %v1248, 2
        %v1250 = vadd.f32 %v1248, %v1249
        %v1251 = vrot.slane %v1250, 1
        %v1252 = vadd.f32 %v1250, %v1251
        %v1253 = vadd.f32 %v1221, %v1225
        %v1254 = vadd.f32 %v1253, %v1229
        %v1255 = vadd.f32 %v1254, %v1233
        %v1256 = vrot.slane %v1255, 4
        %v1257 = vadd.f32 %v1255, %v1256
        %v1258 = vrot.slane %v1257, 2
        %v1259 = vadd.f32 %v1257, %v1258
        %v1260 = vrot.slane %v1259, 1
        %v1261 = vadd.f32 %v1259, %v1260
        %v1262 = vadd.f32 %v1222, %v1226
        %v1263 = vadd.f32 %v1262, %v1230
        %v1264 = vadd.f32 %v1263, %v1234
        %v1265 = vrot.slane %v1264, 4
        %v1266 = vadd.f32 %v1264, %v1265
        %v1267 = vrot.slane %v1266, 2
        %v1268 = vadd.f32 %v1266, %v1267
        %v1269 = vrot.slane %v1268, 1
        %v1270 = vadd.f32 %v1268, %v1269
        %v1271 = vmul.f32 %v1243, 0.03125
        %v1272 = vmul.f32 %v1252, 0.03125
        %v1273 = vmul.f32 %v1261, 0.03125
        %v1274 = vmul.f32 %v1270, 0.03125
        %v1275 = vsub.f32 %v1219, %v1271
        %v1276 = vsub.f32 %v1220, %v1272
        %v1277 = vsub.f32 %v1221, %v1273
        %v1278 = vsub.f32 %v1222, %v1274
        %v1279 = vsub.f32 %v1223, %v1271
        %v1280 = vsub.f32 %v1224, %v1272
        %v1281 = vsub.f32 %v1225, %v1273
        %v1282 = vsub.f32 %v1226, %v1274
        %v1283 = vsub.f32 %v1227, %v1271
        %v1284 = vsub.f32 %v1228, %v1272
        %v1285 = vsub.f32 %v1229, %v1273
        %v1286 = vsub.f32 %v1230, %v1274
        %v1287 = vsub.f32 %v1231, %v1271
        %v1288 = vsub.f32 %v1232, %v1272
        %v1289 = vsub.f32 %v1233, %v1273
        %v1290 = vsub.f32 %v1234, %v1274
        %v1291 = vmul.f32 %v1275, %v1275
        %v1292 = vmul.f32 %v1276, %v1276
        %v1293 = vmul.f32 %v1277, %v1277
        %v1294 = vmul.f32 %v1278, %v1278
        %v1295 = vmul.f32 %v1279, %v1279
        %v1296 = vmul.f32 %v1280, %v1280
        %v1297 = vmul.f32 %v1281, %v1281
        %v1298 = vmul.f32 %v1282, %v1282
        %v1299 = vmul.f32 %v1283, %v1283
        %v1300 = vmul.f32 %v1284, %v1284
        %v1301 = vmul.f32 %v1285, %v1285
        %v1302 = vmul.f32 %v1286, %v1286
        %v1303 = vmul.f32 %v1287, %v1287
        %v1304 = vmul.f32 %v1288, %v1288
        %v1305 = vmul.f32 %v1289, %v1289
        %v1306 = vmul.f32 %v1290, %v1290
        %v1307 = vadd.f32 %v1291, %v1295
        %v1308 = vadd.f32 %v1307, %v1299
        %v1309 = vadd.f32 %v1308, %v1303
        %v1310 = vrot.slane %v1309, 4
        %v1311 = vadd.f32 %v1309, %v1310
        %v1312 = vrot.slane %v1311, 2
        %v1313 = vadd.f32 %v1311, %v1312
        %v1314 = vrot.slane %v1313, 1
        %v1315 = vadd.f32 %v1313, %v1314
        %v1316 = vadd.f32 %v1292, %v1296
        %v1317 = vadd.f32 %v1316, %v1300
        %v1318 = vadd.f32 %v1317, %v1304
        %v1319 = vrot.slane %v1318, 4
        %v1320 = vadd.f32 %v1318, %v1319
        %v1321 = vrot.slane %v1320, 2
        %v1322 = vadd.f32 %v1320, %v1321
        %v1323 = vrot.slane %v1322, 1
        %v1324 = vadd.f32 %v1322, %v1323
        %v1325 = vadd.f32 %v1293, %v1297
        %v1326 = vadd.f32 %v1325, %v1301
        %v1327 = vadd.f32 %v1326, %v1305
        %v1328 = vrot.slane %v1327, 4
        %v1329 = vadd.f32 %v1327, %v1328
        %v1330 = vrot.slane %v1329, 2
        %v1331 = vadd.f32 %v1329, %v1330
        %v1332 = vrot.slane %v1331, 1
        %v1333 = vadd.f32 %v1331, %v1332
        %v1334 = vadd.f32 %v1294, %v1298
        %v1335 = vadd.f32 %v1334, %v1302
        %v1336 = vadd.f32 %v1335, %v1306
        %v1337 = vrot.slane %v1336, 4
        %v1338 = vadd.f32 %v1336, %v1337
        %v1339 = vrot.slane %v1338, 2
        %v1340 = vadd.f32 %v1338, %v1339
        %v1341 = vrot.slane %v1340, 1
        %v1342 = vadd.f32 %v1340, %v1341
        %v1343 = vmul.f32 %v1315, 0.03125
        %v1344 = vmul.f32 %v1324, 0.03125
        %v1345 = vmul.f32 %v1333, 0.03125
        %v1346 = vmul.f32 %v1342, 0.03125
        %v1347 = vadd.f32 %v1343, 1e-05
        %v1348 = vadd.f32 %v1344, 1e-05
        %v1349 = vadd.f32 %v1345, 1e-05
        %v1350 = vadd.f32 %v1346, 1e-05
        %v1351 = vrsqrt.pop %v1347
        %v1352 = vrsqrt.pop %v1348
        %v1353 = vrsqrt.pop %v1349
        %v1354 = vrsqrt.pop %v1350
        %v1355 = vmul.f32 %v1275, %v1351
        %v1356 = vmul.f32 %v1276, %v1352
        %v1357 = vmul.f32 %v1277, %v1353
        %v1358 = vmul.f32 %v1278, %v1354
        %v1359 = vmul.f32 %v1279, %v1351
        %v1360 = vmul.f32 %v1280, %v1352
        %v1361 = vmul.f32 %v1281, %v1353
        %v1362 = vmul.f32 %v1282, %v1354
        %v1363 = vmul.f32 %v1283, %v1351
        %v1364 = vmul.f32 %v1284, %v1352
        %v1365 = vmul.f32 %v1285, %v1353
        %v1366 = vmul.f32 %v1286, %v1354
        %v1367 = vmul.f32 %v1287, %v1351
        %v1368 = vmul.f32 %v1288, %v1352
        %v1369 = vmul.f32 %v1289, %v1353
        %v1370 = vmul.f32 %v1290, %v1354
        %1371 = vset.pattern.permute.xlu0 33
        %1372 = vperm.xlu0 %1371, %v1073
        %v1373 = vpop.permute.xlu0 %1372
        %1375 = vset.pattern.permute.xlu0 33
        %1376 = vperm.xlu0 %1375, %v1074
        %v1377 = vpop.permute.xlu0 %1376
        %1379 = vset.pattern.permute.xlu0 33
        %1380 = vperm.xlu0 %1379, %v1075
        %v1381 = vpop.permute.xlu0 %1380
        %1383 = vset.pattern.permute.xlu0 33
        %1384 = vperm.xlu0 %1383, %v1076
        %v1385 = vpop.permute.xlu0 %1384
        %v1387 = vmul.f32 %v1355, %v1373
        %v1388 = vmul.f32 %v1356, %v1373
        %v1389 = vmul.f32 %v1357, %v1373
        %v1390 = vmul.f32 %v1358, %v1373
        %v1391 = vmul.f32 %v1359, %v1377
        %v1392 = vmul.f32 %v1360, %v1377
        %v1393 = vmul.f32 %v1361, %v1377
        %v1394 = vmul.f32 %v1362, %v1377
        %v1395 = vmul.f32 %v1363, %v1381
        %v1396 = vmul.f32 %v1364, %v1381
        %v1397 = vmul.f32 %v1365, %v1381
        %v1398 = vmul.f32 %v1366, %v1381
        %v1399 = vmul.f32 %v1367, %v1385
        %v1400 = vmul.f32 %v1368, %v1385
        %v1401 = vmul.f32 %v1369, %v1385
        %v1402 = vmul.f32 %v1370, %v1385
        %1403 = vset.pattern.permute.xlu0 34
        %1404 = vperm.xlu0 %1403, %v1073
        %v1405 = vpop.permute.xlu0 %1404
        %1407 = vset.pattern.permute.xlu0 34
        %1408 = vperm.xlu0 %1407, %v1074
        %v1409 = vpop.permute.xlu0 %1408
        %1411 = vset.pattern.permute.xlu0 34
        %1412 = vperm.xlu0 %1411, %v1075
        %v1413 = vpop.permute.xlu0 %1412
        %1415 = vset.pattern.permute.xlu0 34
        %1416 = vperm.xlu0 %1415, %v1076
        %v1417 = vpop.permute.xlu0 %1416
        %v1419 = vadd.f32 %v1387, %v1405
        %v1420 = vadd.f32 %v1388, %v1405
        %v1421 = vadd.f32 %v1389, %v1405
        %v1422 = vadd.f32 %v1390, %v1405
        %v1423 = vadd.f32 %v1391, %v1409
        %v1424 = vadd.f32 %v1392, %v1409
        %v1425 = vadd.f32 %v1393, %v1409
        %v1426 = vadd.f32 %v1394, %v1409
        %v1427 = vadd.f32 %v1395, %v1413
        %v1428 = vadd.f32 %v1396, %v1413
        %v1429 = vadd.f32 %v1397, %v1413
        %v1430 = vadd.f32 %v1398, %v1413
        %v1431 = vadd.f32 %v1399, %v1417
        %v1432 = vadd.f32 %v1400, %v1417
        %v1433 = vadd.f32 %v1401, %v1417
        %v1434 = vadd.f32 %v1402, %v1417
        %v1435 = vmax.f32 %v1419, 0.0
        %v1436 = vmax.f32 %v1420, 0.0
        %v1437 = vmax.f32 %v1421, 0.0
        %v1438 = vmax.f32 %v1422, 0.0
        %v1439 = vmax.f32 %v1423, 0.0
        %v1440 = vmax.f32 %v1424, 0.0
        %v1441 = vmax.f32 %v1425, 0.0
        %v1442 = vmax.f32 %v1426, 0.0
        %v1443 = vmax.f32 %v1427, 0.0
        %v1444 = vmax.f32 %v1428, 0.0
        %v1445 = vmax.f32 %v1429, 0.0
        %v1446 = vmax.f32 %v1430, 0.0
        %v1447 = vmax.f32 %v1431, 0.0
        %v1448 = vmax.f32 %v1432, 0.0
        %v1449 = vmax.f32 %v1433, 0.0
        %v1450 = vmax.f32 %v1434, 0.0
        %v1451 = vld [vmem:[%s1 + $0x18] sm:$0xff]
        %v1452 = vld [vmem:[%s1 + $0x38] sm:$0xff]
        %v1453 = vld [vmem:[%s1 + $0x58] sm:$0xff]
        %v1454 = vld [vmem:[%s1 + $0x78] sm:$0xff]
        %v1455 = vld [vmem:[%s1 + $0x18] ss:$0 sm:$0xff]
        %1456 = vxpose.xlu0.b32.start [1/16] %v1435, 128
        %1457 = vxpose.xlu0.b32.cont [2/16] %v1439, 128
        %1458 = vxpose.xlu0.b32.cont [3/16] %v1443, 128
        %1459 = vxpose.xlu0.b32.cont [4/16] %v1447, 128
        %1460 = vxpose.xlu0.b32.cont [5/16] 0.0, 128
        %1461 = vxpose.xlu0.b32.cont [6/16] 0.0, 128
        %1462 = vxpose.xlu0.b32.cont [7/16] 0.0, 128
        %1463 = vxpose.xlu0.b32.cont [8/16] 0.0, 128
        %1464 = vxpose.xlu0.b32.cont [9/16] 0.0, 128
        %1465 = vxpose.xlu0.b32.cont [10/16] 0.0, 128
        %1466 = vxpose.xlu0.b32.cont [11/16] 0.0, 128
        %1467 = vxpose.xlu0.b32.cont [12/16] 0.0, 128
        %1468 = vxpose.xlu0.b32.cont [13/16] 0.0, 128
        %1469 = vxpose.xlu0.b32.cont [14/16] 0.0, 128
        %1470 = vxpose.xlu0.b32.cont [15/16] 0.0, 128
        %1471 = vxpose.xlu0.b32.end [16/16] 0.0, 128
        %v1472 = vpop.trf.xlu0
        %v1473 = vpop.trf.xlu0
        %v1474 = vpop.trf.xlu0
        %v1475 = vpop.trf.xlu0
        %v1476 = vpop.trf.xlu0
        %v1477 = vpop.trf.xlu0
        %v1478 = vpop.trf.xlu0
        %v1479 = vpop.trf.xlu0
        %v1480 = vpop.trf.xlu0
        %v1481 = vpop.trf.xlu0
        %v1482 = vpop.trf.xlu0
        %v1483 = vpop.trf.xlu0
        %v1484 = vpop.trf.xlu0
        %v1485 = vpop.trf.xlu0
        %v1486 = vpop.trf.xlu0
        %v1487 = vpop.trf.xlu0
        %1488 = vxpose.xlu0.b32.start [1/16] %v1436, 128
        %1489 = vxpose.xlu0.b32.cont [2/16] %v1440, 128
        %1490 = vxpose.xlu0.b32.cont [3/16] %v1444, 128
        %1491 = vxpose.xlu0.b32.cont [4/16] %v1448, 128
        %1492 = vxpose.xlu0.b32.cont [5/16] 0.0, 128
        %1493 = vxpose.xlu0.b32.cont [6/16] 0.0, 128
        %1494 = vxpose.xlu0.b32.cont [7/16] 0.0, 128
        %1495 = vxpose.xlu0.b32.cont [8/16] 0.0, 128
        %1496 = vxpose.xlu0.b32.cont [9/16] 0.0, 128
        %1497 = vxpose.xlu0.b32.cont [10/16] 0.0, 128
        %1498 = vxpose.xlu0.b32.cont [11/16] 0.0, 128
        %1499 = vxpose.xlu0.b32.cont [12/16] 0.0, 128
        %1500 = vxpose.xlu0.b32.cont [13/16] 0.0, 128
        %1501 = vxpose.xlu0.b32.cont [14/16] 0.0, 128
        %1502 = vxpose.xlu0.b32.cont [15/16] 0.0, 128
        %1503 = vxpose.xlu0.b32.end [16/16] 0.0, 128
        %v1504 = vpop.trf.xlu0
        %v1505 = vpop.trf.xlu0
        %v1506 = vpop.trf.xlu0
        %v1507 = vpop.trf.xlu0
        %v1508 = vpop.trf.xlu0
        %v1509 = vpop.trf.xlu0
        %v1510 = vpop.trf.xlu0
        %v1511 = vpop.trf.xlu0
        %v1512 = vpop.trf.xlu0
        %v1513 = vpop.trf.xlu0
        %v1514 = vpop.trf.xlu0
        %v1515 = vpop.trf.xlu0
        %v1516 = vpop.trf.xlu0
        %v1517 = vpop.trf.xlu0
        %v1518 = vpop.trf.xlu0
        %v1519 = vpop.trf.xlu0
        %1520 = vxpose.xlu0.b32.start [1/16] %v1437, 128
        %1521 = vxpose.xlu0.b32.cont [2/16] %v1441, 128
        %1522 = vxpose.xlu0.b32.cont [3/16] %v1445, 128
        %1523 = vxpose.xlu0.b32.cont [4/16] %v1449, 128
        %1524 = vxpose.xlu0.b32.cont [5/16] 0.0, 128
        %1525 = vxpose.xlu0.b32.cont [6/16] 0.0, 128
        %1526 = vxpose.xlu0.b32.cont [7/16] 0.0, 128
        %1527 = vxpose.xlu0.b32.cont [8/16] 0.0, 128
        %1528 = vxpose.xlu0.b32.cont [9/16] 0.0, 128
        %1529 = vxpose.xlu0.b32.cont [10/16] 0.0, 128
        %1530 = vxpose.xlu0.b32.cont [11/16] 0.0, 128
        %1531 = vxpose.xlu0.b32.cont [12/16] 0.0, 128
        %1532 = vxpose.xlu0.b32.cont [13/16] 0.0, 128
        %1533 = vxpose.xlu0.b32.cont [14/16] 0.0, 128
        %1534 = vxpose.xlu0.b32.cont [15/16] 0.0, 128
        %1535 = vxpose.xlu0.b32.end [16/16] 0.0, 128
        %v1536 = vpop.trf.xlu0
        %v1537 = vpop.trf.xlu0
        %v1538 = vpop.trf.xlu0
        %v1539 = vpop.trf.xlu0
        %v1540 = vpop.trf.xlu0
        %v1541 = vpop.trf.xlu0
        %v1542 = vpop.trf.xlu0
        %v1543 = vpop.trf.xlu0
        %v1544 = vpop.trf.xlu0
        %v1545 = vpop.trf.xlu0
        %v1546 = vpop.trf.xlu0
        %v1547 = vpop.trf.xlu0
        %v1548 = vpop.trf.xlu0
        %v1549 = vpop.trf.xlu0
        %v1550 = vpop.trf.xlu0
        %v1551 = vpop.trf.xlu0
        %1552 = vxpose.xlu0.b32.start [1/16] %v1438, 128
        %1553 = vxpose.xlu0.b32.cont [2/16] %v1442, 128
        %1554 = vxpose.xlu0.b32.cont [3/16] %v1446, 128
        %1555 = vxpose.xlu0.b32.cont [4/16] %v1450, 128
        %1556 = vxpose.xlu0.b32.cont [5/16] 0.0, 128
        %1557 = vxpose.xlu0.b32.cont [6/16] 0.0, 128
        %1558 = vxpose.xlu0.b32.cont [7/16] 0.0, 128
        %1559 = vxpose.xlu0.b32.cont [8/16] 0.0, 128
        %1560 = vxpose.xlu0.b32.cont [9/16] 0.0, 128
        %1561 = vxpose.xlu0.b32.cont [10/16] 0.0, 128
        %1562 = vxpose.xlu0.b32.cont [11/16] 0.0, 128
        %1563 = vxpose.xlu0.b32.cont [12/16] 0.0, 128
        %1564 = vxpose.xlu0.b32.cont [13/16] 0.0, 128
        %1565 = vxpose.xlu0.b32.cont [14/16] 0.0, 128
        %1566 = vxpose.xlu0.b32.cont [15/16] 0.0, 128
        %1567 = vxpose.xlu0.b32.end [16/16] 0.0, 128
        %v1568 = vpop.trf.xlu0
        %v1569 = vpop.trf.xlu0
        %v1570 = vpop.trf.xlu0
        %v1571 = vpop.trf.xlu0
        %v1572 = vpop.trf.xlu0
        %v1573 = vpop.trf.xlu0
        %v1574 = vpop.trf.xlu0
        %v1575 = vpop.trf.xlu0
        %v1576 = vpop.trf.xlu0
        %v1577 = vpop.trf.xlu0
        %v1578 = vpop.trf.xlu0
        %v1579 = vpop.trf.xlu0
        %v1580 = vpop.trf.xlu0
        %v1581 = vpop.trf.xlu0
        %v1582 = vpop.trf.xlu0
        %v1583 = vpop.trf.xlu0
        %v1584 = vpack.c.bf16 %v1473, %v1472
        %v1585 = vpack.c.bf16 %v1475, %v1474
        %v1586 = vpack.c.bf16 %v1477, %v1476
        %v1587 = vpack.c.bf16 %v1479, %v1478
        %v1588 = vpack.c.bf16 %v1481, %v1480
        %v1589 = vpack.c.bf16 %v1483, %v1482
        %v1590 = vpack.c.bf16 %v1485, %v1484
        %v1591 = vpack.c.bf16 %v1487, %v1486
        %v1592 = vpack.c.bf16 %v1505, %v1504
        %v1593 = vpack.c.bf16 %v1507, %v1506
        %v1594 = vpack.c.bf16 %v1509, %v1508
        %v1595 = vpack.c.bf16 %v1511, %v1510
        %v1596 = vpack.c.bf16 %v1513, %v1512
        %v1597 = vpack.c.bf16 %v1515, %v1514
        %v1598 = vpack.c.bf16 %v1517, %v1516
        %v1599 = vpack.c.bf16 %v1519, %v1518
        %v1600 = vpack.c.bf16 %v1537, %v1536
        %v1601 = vpack.c.bf16 %v1539, %v1538
        %v1602 = vpack.c.bf16 %v1541, %v1540
        %v1603 = vpack.c.bf16 %v1543, %v1542
        %v1604 = vpack.c.bf16 %v1545, %v1544
        %v1605 = vpack.c.bf16 %v1547, %v1546
        %v1606 = vpack.c.bf16 %v1549, %v1548
        %v1607 = vpack.c.bf16 %v1551, %v1550
        %v1608 = vpack.c.bf16 %v1569, %v1568
        %v1609 = vpack.c.bf16 %v1571, %v1570
        %v1610 = vpack.c.bf16 %v1573, %v1572
        %v1611 = vpack.c.bf16 %v1575, %v1574
        %v1612 = vpack.c.bf16 %v1577, %v1576
        %v1613 = vpack.c.bf16 %v1579, %v1578
        %v1614 = vpack.c.bf16 %v1581, %v1580
        %v1615 = vpack.c.bf16 %v1583, %v1582
        %v1616 = vpack.c.bf16 %v1452, %v1451
        %v1617 = vpack.c.bf16 %v1454, %v1453
        %1619 = vrot.lane.b32.xlu0 %v1455, 112
        %v1620 = vpop.permute.xlu0 %1619
        %v1623 = vsel %vm382, %v1584, 0
        %v1626 = vsel %vm382, %v1585, 0
        %v1629 = vsel %vm382, %v1586, 0
        %v1632 = vsel %vm382, %v1587, 0
        %v1635 = vsel %vm382, %v1588, 0
        %v1638 = vsel %vm382, %v1589, 0
        %v1641 = vsel %vm382, %v1590, 0
        %v1644 = vsel %vm382, %v1591, 0
        %v1647 = vsel %vm382, %v1592, 0
        %v1650 = vsel %vm382, %v1593, 0
        %v1653 = vsel %vm382, %v1594, 0
        %v1656 = vsel %vm382, %v1595, 0
        %v1659 = vsel %vm382, %v1596, 0
        %v1662 = vsel %vm382, %v1597, 0
        %v1665 = vsel %vm382, %v1598, 0
        %v1668 = vsel %vm382, %v1599, 0
        %v1671 = vsel %vm382, %v1600, 0
        %v1674 = vsel %vm382, %v1601, 0
        %v1677 = vsel %vm382, %v1602, 0
        %v1680 = vsel %vm382, %v1603, 0
        %v1683 = vsel %vm382, %v1604, 0
        %v1686 = vsel %vm382, %v1605, 0
        %v1689 = vsel %vm382, %v1606, 0
        %v1692 = vsel %vm382, %v1607, 0
        %v1695 = vsel %vm382, %v1608, 0
        %v1698 = vsel %vm382, %v1609, 0
        %v1701 = vsel %vm382, %v1610, 0
        %v1704 = vsel %vm382, %v1611, 0
        %v1707 = vsel %vm382, %v1612, 0
        %v1710 = vsel %vm382, %v1613, 0
        %v1713 = vsel %vm382, %v1614, 0
        %v1716 = vsel %vm382, %v1615, 0
        %1718 = vmatprep.subr.bf16.mxu0 0
        %1719 = vmatpush1.bf16.msra.mxu0 %v1616
        %1720 = vmatprep.subr.bf16.mxu0 0
        %1721 = vmatpush1.bf16.msra.mxu0 %v1617
        %1722 = vmatprep.subr.bf16.mxu0 0
        %1723 = vmatpush1.bf16.msra.mxu0 0
        %1724 = vmatprep.subr.bf16.mxu0 0
        %1725 = vmatpush1.bf16.msra.mxu0 0
        %1726 = vmatprep.subr.bf16.mxu0 0
        %1727 = vmatpush1.bf16.msra.mxu0 0
        %1728 = vmatprep.subr.bf16.mxu0 0
        %1729 = vmatpush1.bf16.msra.mxu0 0
        %1730 = vmatprep.subr.bf16.mxu0 0
        %1731 = vmatpush1.bf16.msra.mxu0 0
        %1732 = vmatprep.subr.bf16.mxu0 0
        %1733 = vmatpush1.bf16.msra.mxu0 0
        %1734 = vmatprep.subr.bf16.mxu0 0
        %1735 = vmatpush1.bf16.msra.mxu0 0
        %1736 = vmatprep.subr.bf16.mxu0 0
        %1737 = vmatpush1.bf16.msra.mxu0 0
        %1738 = vmatprep.subr.bf16.mxu0 0
        %1739 = vmatpush1.bf16.msra.mxu0 0
        %1740 = vmatprep.subr.bf16.mxu0 0
        %1741 = vmatpush1.bf16.msra.mxu0 0
        %1742 = vmatprep.subr.bf16.mxu0 0
        %1743 = vmatpush1.bf16.msra.mxu0 0
        %1744 = vmatprep.subr.bf16.mxu0 0
        %1745 = vmatpush1.bf16.msra.mxu0 0
        %1746 = vmatprep.subr.bf16.mxu0 0
        %1747 = vmatpush1.bf16.msra.mxu0 0
        %1748 = vmatprep.subr.bf16.mxu0 0
        %1749 = vmatpush1.bf16.msra.mxu0 0
        %1750 = vmatprep.mubr.bf16.mxu0 0
        %1751 = vmatmul.mubr.bf16.gmra.mrb[0].mxu0 %v1623
        %v1752 = vpop.f32.mrb[0].mxu0
        %v1753 = vadd.f32 %v1620, %v1752
        %v1754 = vpop.f32.mrb[0].mxu0
        %v1755 = vpop.f32.mrb[0].mxu0
        %v1756 = vadd.f32 %v1620, %v1755
        %v1757 = vpop.f32.mrb[0].mxu0
        %1758 = vmatprep.mubr.bf16.mxu0 0
        %1759 = vmatmul.mubr.bf16.gmra.mrb[0].mxu0 %v1626
        %v1760 = vpop.f32.mrb[0].mxu0
        %v1761 = vadd.f32 %v1620, %v1760
        %v1762 = vpop.f32.mrb[0].mxu0
        %v1763 = vpop.f32.mrb[0].mxu0
        %v1764 = vadd.f32 %v1620, %v1763
        %v1765 = vpop.f32.mrb[0].mxu0
        %1766 = vmatprep.mubr.bf16.mxu0 0
        %1767 = vmatmul.mubr.bf16.gmra.mrb[0].mxu0 %v1629
        %v1768 = vpop.f32.mrb[0].mxu0
        %v1769 = vadd.f32 %v1620, %v1768
        %v1770 = vpop.f32.mrb[0].mxu0
        %v1771 = vpop.f32.mrb[0].mxu0
        %v1772 = vadd.f32 %v1620, %v1771
        %v1773 = vpop.f32.mrb[0].mxu0
        %1774 = vmatprep.mubr.bf16.mxu0 0
        %1775 = vmatmul.mubr.bf16.gmra.mrb[0].mxu0 %v1632
        %v1776 = vpop.f32.mrb[0].mxu0
        %v1777 = vadd.f32 %v1620, %v1776
        %v1778 = vpop.f32.mrb[0].mxu0
        %v1779 = vpop.f32.mrb[0].mxu0
        %v1780 = vadd.f32 %v1620, %v1779
        %v1781 = vpop.f32.mrb[0].mxu0
        %1782 = vmatprep.mubr.bf16.mxu0 0
        %1783 = vmatmul.mubr.bf16.gmra.mrb[0].mxu0 %v1635
        %v1784 = vpop.f32.mrb[0].mxu0
        %v1785 = vadd.f32 %v1620, %v1784
        %v1786 = vpop.f32.mrb[0].mxu0
        %v1787 = vpop.f32.mrb[0].mxu0
        %v1788 = vadd.f32 %v1620, %v1787
        %v1789 = vpop.f32.mrb[0].mxu0
        %1790 = vmatprep.mubr.bf16.mxu0 0
        %1791 = vmatmul.mubr.bf16.gmra.mrb[0].mxu0 %v1638
        %v1792 = vpop.f32.mrb[0].mxu0
        %v1793 = vadd.f32 %v1620, %v1792
        %v1794 = vpop.f32.mrb[0].mxu0
        %v1795 = vpop.f32.mrb[0].mxu0
        %v1796 = vadd.f32 %v1620, %v1795
        %v1797 = vpop.f32.mrb[0].mxu0
        %1798 = vmatprep.mubr.bf16.mxu0 0
        %1799 = vmatmul.mubr.bf16.gmra.mrb[0].mxu0 %v1641
        %v1800 = vpop.f32.mrb[0].mxu0
        %v1801 = vadd.f32 %v1620, %v1800
        %v1802 = vpop.f32.mrb[0].mxu0
        %v1803 = vpop.f32.mrb[0].mxu0
        %v1804 = vadd.f32 %v1620, %v1803
        %v1805 = vpop.f32.mrb[0].mxu0
        %1806 = vmatprep.mubr.bf16.mxu0 0
        %1807 = vmatmul.mubr.bf16.gmra.mrb[0].mxu0 %v1644
        %v1808 = vpop.f32.mrb[0].mxu0
        %v1809 = vadd.f32 %v1620, %v1808
        %v1810 = vpop.f32.mrb[0].mxu0
        %v1811 = vpop.f32.mrb[0].mxu0
        %v1812 = vadd.f32 %v1620, %v1811
        %v1813 = vpop.f32.mrb[0].mxu0
        %1814 = vmatprep.mubr.bf16.mxu0 0
        %1815 = vmatmul.mubr.bf16.gmra.mrb[0].mxu0 %v1647
        %v1816 = vpop.f32.mrb[0].mxu0
        %v1817 = vadd.f32 %v1620, %v1816
        %v1818 = vpop.f32.mrb[0].mxu0
        %v1819 = vpop.f32.mrb[0].mxu0
        %v1820 = vadd.f32 %v1620, %v1819
        %v1821 = vpop.f32.mrb[0].mxu0
        %1822 = vmatprep.mubr.bf16.mxu0 0
        %1823 = vmatmul.mubr.bf16.gmra.mrb[0].mxu0 %v1650
        %v1824 = vpop.f32.mrb[0].mxu0
        %v1825 = vadd.f32 %v1620, %v1824
        %v1826 = vpop.f32.mrb[0].mxu0
        %v1827 = vpop.f32.mrb[0].mxu0
        %v1828 = vadd.f32 %v1620, %v1827
        %v1829 = vpop.f32.mrb[0].mxu0
        %1830 = vmatprep.mubr.bf16.mxu0 0
        %1831 = vmatmul.mubr.bf16.gmra.mrb[0].mxu0 %v1653
        %v1832 = vpop.f32.mrb[0].mxu0
        %v1833 = vadd.f32 %v1620, %v1832
        %v1834 = vpop.f32.mrb[0].mxu0
        %v1835 = vpop.f32.mrb[0].mxu0
        %v1836 = vadd.f32 %v1620, %v1835
        %v1837 = vpop.f32.mrb[0].mxu0
        %1838 = vmatprep.mubr.bf16.mxu0 0
        %1839 = vmatmul.mubr.bf16.gmra.mrb[0].mxu0 %v1656
        %v1840 = vpop.f32.mrb[0].mxu0
        %v1841 = vadd.f32 %v1620, %v1840
        %v1842 = vpop.f32.mrb[0].mxu0
        %v1843 = vpop.f32.mrb[0].mxu0
        %v1844 = vadd.f32 %v1620, %v1843
        %v1845 = vpop.f32.mrb[0].mxu0
        %1846 = vmatprep.mubr.bf16.mxu0 0
        %1847 = vmatmul.mubr.bf16.gmra.mrb[0].mxu0 %v1659
        %v1848 = vpop.f32.mrb[0].mxu0
        %v1849 = vadd.f32 %v1620, %v1848
        %v1850 = vpop.f32.mrb[0].mxu0
        %v1851 = vpop.f32.mrb[0].mxu0
        %v1852 = vadd.f32 %v1620, %v1851
        %v1853 = vpop.f32.mrb[0].mxu0
        %1854 = vmatprep.mubr.bf16.mxu0 0
        %1855 = vmatmul.mubr.bf16.gmra.mrb[0].mxu0 %v1662
        %v1856 = vpop.f32.mrb[0].mxu0
        %v1857 = vadd.f32 %v1620, %v1856
        %v1858 = vpop.f32.mrb[0].mxu0
        %v1859 = vpop.f32.mrb[0].mxu0
        %v1860 = vadd.f32 %v1620, %v1859
        %v1861 = vpop.f32.mrb[0].mxu0
        %1862 = vmatprep.mubr.bf16.mxu0 0
        %1863 = vmatmul.mubr.bf16.gmra.mrb[0].mxu0 %v1665
        %v1864 = vpop.f32.mrb[0].mxu0
        %v1865 = vadd.f32 %v1620, %v1864
        %v1866 = vpop.f32.mrb[0].mxu0
        %v1867 = vpop.f32.mrb[0].mxu0
        %v1868 = vadd.f32 %v1620, %v1867
        %v1869 = vpop.f32.mrb[0].mxu0
        %1870 = vmatprep.mubr.bf16.mxu0 0
        %1871 = vmatmul.mubr.bf16.gmra.mrb[0].mxu0 %v1668
        %v1872 = vpop.f32.mrb[0].mxu0
        %v1873 = vadd.f32 %v1620, %v1872
        %v1874 = vpop.f32.mrb[0].mxu0
        %v1875 = vpop.f32.mrb[0].mxu0
        %v1876 = vadd.f32 %v1620, %v1875
        %v1877 = vpop.f32.mrb[0].mxu0
        %1878 = vmatprep.mubr.bf16.mxu0 0
        %1879 = vmatmul.mubr.bf16.gmra.mrb[0].mxu0 %v1671
        %v1880 = vpop.f32.mrb[0].mxu0
        %v1881 = vadd.f32 %v1620, %v1880
        %v1882 = vpop.f32.mrb[0].mxu0
        %v1883 = vpop.f32.mrb[0].mxu0
        %v1884 = vadd.f32 %v1620, %v1883
        %v1885 = vpop.f32.mrb[0].mxu0
        %1886 = vmatprep.mubr.bf16.mxu0 0
        %1887 = vmatmul.mubr.bf16.gmra.mrb[0].mxu0 %v1674
        %v1888 = vpop.f32.mrb[0].mxu0
        %v1889 = vadd.f32 %v1620, %v1888
        %v1890 = vpop.f32.mrb[0].mxu0
        %v1891 = vpop.f32.mrb[0].mxu0
        %v1892 = vadd.f32 %v1620, %v1891
        %v1893 = vpop.f32.mrb[0].mxu0
        %1894 = vmatprep.mubr.bf16.mxu0 0
        %1895 = vmatmul.mubr.bf16.gmra.mrb[0].mxu0 %v1677
        %v1896 = vpop.f32.mrb[0].mxu0
        %v1897 = vadd.f32 %v1620, %v1896
        %v1898 = vpop.f32.mrb[0].mxu0
        %v1899 = vpop.f32.mrb[0].mxu0
        %v1900 = vadd.f32 %v1620, %v1899
        %v1901 = vpop.f32.mrb[0].mxu0
        %1902 = vmatprep.mubr.bf16.mxu0 0
        %1903 = vmatmul.mubr.bf16.gmra.mrb[0].mxu0 %v1680
        %v1904 = vpop.f32.mrb[0].mxu0
        %v1905 = vadd.f32 %v1620, %v1904
        %v1906 = vpop.f32.mrb[0].mxu0
        %v1907 = vpop.f32.mrb[0].mxu0
        %v1908 = vadd.f32 %v1620, %v1907
        %v1909 = vpop.f32.mrb[0].mxu0
        %1910 = vmatprep.mubr.bf16.mxu0 0
        %1911 = vmatmul.mubr.bf16.gmra.mrb[0].mxu0 %v1683
        %v1912 = vpop.f32.mrb[0].mxu0
        %v1913 = vadd.f32 %v1620, %v1912
        %v1914 = vpop.f32.mrb[0].mxu0
        %v1915 = vpop.f32.mrb[0].mxu0
        %v1916 = vadd.f32 %v1620, %v1915
        %v1917 = vpop.f32.mrb[0].mxu0
        %1918 = vmatprep.mubr.bf16.mxu0 0
        %1919 = vmatmul.mubr.bf16.gmra.mrb[0].mxu0 %v1686
        %v1920 = vpop.f32.mrb[0].mxu0
        %v1921 = vadd.f32 %v1620, %v1920
        %v1922 = vpop.f32.mrb[0].mxu0
        %v1923 = vpop.f32.mrb[0].mxu0
        %v1924 = vadd.f32 %v1620, %v1923
        %v1925 = vpop.f32.mrb[0].mxu0
        %1926 = vmatprep.mubr.bf16.mxu0 0
        %1927 = vmatmul.mubr.bf16.gmra.mrb[0].mxu0 %v1689
        %v1928 = vpop.f32.mrb[0].mxu0
        %v1929 = vadd.f32 %v1620, %v1928
        %v1930 = vpop.f32.mrb[0].mxu0
        %v1931 = vpop.f32.mrb[0].mxu0
        %v1932 = vadd.f32 %v1620, %v1931
        %v1933 = vpop.f32.mrb[0].mxu0
        %1934 = vmatprep.mubr.bf16.mxu0 0
        %1935 = vmatmul.mubr.bf16.gmra.mrb[0].mxu0 %v1692
        %v1936 = vpop.f32.mrb[0].mxu0
        %v1937 = vadd.f32 %v1620, %v1936
        %v1938 = vpop.f32.mrb[0].mxu0
        %v1939 = vpop.f32.mrb[0].mxu0
        %v1940 = vadd.f32 %v1620, %v1939
        %v1941 = vpop.f32.mrb[0].mxu0
        %1942 = vmatprep.mubr.bf16.mxu0 0
        %1943 = vmatmul.mubr.bf16.gmra.mrb[0].mxu0 %v1695
        %v1944 = vpop.f32.mrb[0].mxu0
        %v1945 = vadd.f32 %v1620, %v1944
        %v1946 = vpop.f32.mrb[0].mxu0
        %v1947 = vpop.f32.mrb[0].mxu0
        %v1948 = vadd.f32 %v1620, %v1947
        %v1949 = vpop.f32.mrb[0].mxu0
        %1950 = vmatprep.mubr.bf16.mxu0 0
        %1951 = vmatmul.mubr.bf16.gmra.mrb[0].mxu0 %v1698
        %v1952 = vpop.f32.mrb[0].mxu0
        %v1953 = vadd.f32 %v1620, %v1952
        %v1954 = vpop.f32.mrb[0].mxu0
        %v1955 = vpop.f32.mrb[0].mxu0
        %v1956 = vadd.f32 %v1620, %v1955
        %v1957 = vpop.f32.mrb[0].mxu0
        %1958 = vmatprep.mubr.bf16.mxu0 0
        %1959 = vmatmul.mubr.bf16.gmra.mrb[0].mxu0 %v1701
        %v1960 = vpop.f32.mrb[0].mxu0
        %v1961 = vadd.f32 %v1620, %v1960
        %v1962 = vpop.f32.mrb[0].mxu0
        %v1963 = vpop.f32.mrb[0].mxu0
        %v1964 = vadd.f32 %v1620, %v1963
        %v1965 = vpop.f32.mrb[0].mxu0
        %1966 = vmatprep.mubr.bf16.mxu0 0
        %1967 = vmatmul.mubr.bf16.gmra.mrb[0].mxu0 %v1704
        %v1968 = vpop.f32.mrb[0].mxu0
        %v1969 = vadd.f32 %v1620, %v1968
        %v1970 = vpop.f32.mrb[0].mxu0
        %v1971 = vpop.f32.mrb[0].mxu0
        %v1972 = vadd.f32 %v1620, %v1971
        %v1973 = vpop.f32.mrb[0].mxu0
        %1974 = vmatprep.mubr.bf16.mxu0 0
        %1975 = vmatmul.mubr.bf16.gmra.mrb[0].mxu0 %v1707
        %v1976 = vpop.f32.mrb[0].mxu0
        %v1977 = vadd.f32 %v1620, %v1976
        %v1978 = vpop.f32.mrb[0].mxu0
        %v1979 = vpop.f32.mrb[0].mxu0
        %v1980 = vadd.f32 %v1620, %v1979
        %v1981 = vpop.f32.mrb[0].mxu0
        %1982 = vmatprep.mubr.bf16.mxu0 0
        %1983 = vmatmul.mubr.bf16.gmra.mrb[0].mxu0 %v1710
        %v1984 = vpop.f32.mrb[0].mxu0
        %v1985 = vadd.f32 %v1620, %v1984
        %v1986 = vpop.f32.mrb[0].mxu0
        %v1987 = vpop.f32.mrb[0].mxu0
        %v1988 = vadd.f32 %v1620, %v1987
        %v1989 = vpop.f32.mrb[0].mxu0
        %1990 = vmatprep.mubr.bf16.mxu0 0
        %1991 = vmatmul.mubr.bf16.gmra.mrb[0].mxu0 %v1713
        %v1992 = vpop.f32.mrb[0].mxu0
        %v1993 = vadd.f32 %v1620, %v1992
        %v1994 = vpop.f32.mrb[0].mxu0
        %v1995 = vpop.f32.mrb[0].mxu0
        %v1996 = vadd.f32 %v1620, %v1995
        %v1997 = vpop.f32.mrb[0].mxu0
        %1998 = vmatprep.mubr.bf16.mxu0 0
        %1999 = vmatmul.mubr.bf16.gmra.mrb[0].mxu0 %v1716
        %v2000 = vpop.f32.mrb[0].mxu0
        %v2001 = vadd.f32 %v1620, %v2000
        %v2002 = vpop.f32.mrb[0].mxu0
        %v2003 = vpop.f32.mrb[0].mxu0
        %v2004 = vadd.f32 %v1620, %v2003
        %v2005 = vpop.f32.mrb[0].mxu0
        %2006 = vdwg.mxu0
        %s2007 = scalar_lea.vmem %s145, %s154
        %vm2008 = vcmask 130048
        %2009 = vst.msk [vmem:[%s2007] sm:$0xff] %vm2008, %v1753
        %2010 = vst.msk [vmem:[%s2007 + $0x8] sm:$0xff] %vm2008, %v1756
        %2011 = vst.msk [vmem:[%s2007 + $0x10] sm:$0xff] %vm2008, %v1761
        %2012 = vst.msk [vmem:[%s2007 + $0x18] sm:$0xff] %vm2008, %v1764
        %2013 = vst.msk [vmem:[%s2007 + $0x20] sm:$0xff] %vm2008, %v1769
        %2014 = vst.msk [vmem:[%s2007 + $0x28] sm:$0xff] %vm2008, %v1772
        %2015 = vst.msk [vmem:[%s2007 + $0x30] sm:$0xff] %vm2008, %v1777
        %2016 = vst.msk [vmem:[%s2007 + $0x38] sm:$0xff] %vm2008, %v1780
        %2017 = vst.msk [vmem:[%s2007 + $0x40] sm:$0xff] %vm2008, %v1785
        %2018 = vst.msk [vmem:[%s2007 + $0x48] sm:$0xff] %vm2008, %v1788
        %2019 = vst.msk [vmem:[%s2007 + $0x50] sm:$0xff] %vm2008, %v1793
        %2020 = vst.msk [vmem:[%s2007 + $0x58] sm:$0xff] %vm2008, %v1796
        %2021 = vst.msk [vmem:[%s2007 + $0x60] sm:$0xff] %vm2008, %v1801
        %2022 = vst.msk [vmem:[%s2007 + $0x68] sm:$0xff] %vm2008, %v1804
        %2023 = vst.msk [vmem:[%s2007 + $0x70] sm:$0xff] %vm2008, %v1809
        %2024 = vst.msk [vmem:[%s2007 + $0x78] sm:$0xff] %vm2008, %v1812
        %2025 = vst.msk [vmem:[%s2007 + $0x80] sm:$0xff] %vm2008, %v1817
        %2026 = vst.msk [vmem:[%s2007 + $0x88] sm:$0xff] %vm2008, %v1820
        %2027 = vst.msk [vmem:[%s2007 + $0x90] sm:$0xff] %vm2008, %v1825
        %2028 = vst.msk [vmem:[%s2007 + $0x98] sm:$0xff] %vm2008, %v1828
        %2029 = vst.msk [vmem:[%s2007 + $0xa0] sm:$0xff] %vm2008, %v1833
        %2030 = vst.msk [vmem:[%s2007 + $0xa8] sm:$0xff] %vm2008, %v1836
        %2031 = vst.msk [vmem:[%s2007 + $0xb0] sm:$0xff] %vm2008, %v1841
        %2032 = vst.msk [vmem:[%s2007 + $0xb8] sm:$0xff] %vm2008, %v1844
        %2033 = vst.msk [vmem:[%s2007 + $0xc0] sm:$0xff] %vm2008, %v1849
        %2034 = vst.msk [vmem:[%s2007 + $0xc8] sm:$0xff] %vm2008, %v1852
        %2035 = vst.msk [vmem:[%s2007 + $0xd0] sm:$0xff] %vm2008, %v1857
        %2036 = vst.msk [vmem:[%s2007 + $0xd8] sm:$0xff] %vm2008, %v1860
        %2037 = vst.msk [vmem:[%s2007 + $0xe0] sm:$0xff] %vm2008, %v1865
        %2038 = vst.msk [vmem:[%s2007 + $0xe8] sm:$0xff] %vm2008, %v1868
        %2039 = vst.msk [vmem:[%s2007 + $0xf0] sm:$0xff] %vm2008, %v1873
        %2040 = vst.msk [vmem:[%s2007 + $0xf8] sm:$0xff] %vm2008, %v1876
        %2041 = vst.msk [vmem:[%s2007 + $0x100] sm:$0xff] %vm2008, %v1881
        %2042 = vst.msk [vmem:[%s2007 + $0x108] sm:$0xff] %vm2008, %v1884
        %2043 = vst.msk [vmem:[%s2007 + $0x110] sm:$0xff] %vm2008, %v1889
        %2044 = vst.msk [vmem:[%s2007 + $0x118] sm:$0xff] %vm2008, %v1892
        %2045 = vst.msk [vmem:[%s2007 + $0x120] sm:$0xff] %vm2008, %v1897
        %2046 = vst.msk [vmem:[%s2007 + $0x128] sm:$0xff] %vm2008, %v1900
        %2047 = vst.msk [vmem:[%s2007 + $0x130] sm:$0xff] %vm2008, %v1905
        %2048 = vst.msk [vmem:[%s2007 + $0x138] sm:$0xff] %vm2008, %v1908
        %2049 = vst.msk [vmem:[%s2007 + $0x140] sm:$0xff] %vm2008, %v1913
        %2050 = vst.msk [vmem:[%s2007 + $0x148] sm:$0xff] %vm2008, %v1916
        %2051 = vst.msk [vmem:[%s2007 + $0x150] sm:$0xff] %vm2008, %v1921
        %2052 = vst.msk [vmem:[%s2007 + $0x158] sm:$0xff] %vm2008, %v1924
        %2053 = vst.msk [vmem:[%s2007 + $0x160] sm:$0xff] %vm2008, %v1929
        %2054 = vst.msk [vmem:[%s2007 + $0x168] sm:$0xff] %vm2008, %v1932
        %2055 = vst.msk [vmem:[%s2007 + $0x170] sm:$0xff] %vm2008, %v1937
        %2056 = vst.msk [vmem:[%s2007 + $0x178] sm:$0xff] %vm2008, %v1940
        %2057 = vst.msk [vmem:[%s2007 + $0x180] sm:$0xff] %vm2008, %v1945
        %2058 = vst.msk [vmem:[%s2007 + $0x188] sm:$0xff] %vm2008, %v1948
        %2059 = vst.msk [vmem:[%s2007 + $0x190] sm:$0xff] %vm2008, %v1953
        %2060 = vst.msk [vmem:[%s2007 + $0x198] sm:$0xff] %vm2008, %v1956
        %2061 = vst.msk [vmem:[%s2007 + $0x1a0] sm:$0xff] %vm2008, %v1961
        %2062 = vst.msk [vmem:[%s2007 + $0x1a8] sm:$0xff] %vm2008, %v1964
        %2063 = vst.msk [vmem:[%s2007 + $0x1b0] sm:$0xff] %vm2008, %v1969
        %2064 = vst.msk [vmem:[%s2007 + $0x1b8] sm:$0xff] %vm2008, %v1972
        %2065 = vst.msk [vmem:[%s2007 + $0x1c0] sm:$0xff] %vm2008, %v1977
        %2066 = vst.msk [vmem:[%s2007 + $0x1c8] sm:$0xff] %vm2008, %v1980
        %2067 = vst.msk [vmem:[%s2007 + $0x1d0] sm:$0xff] %vm2008, %v1985
        %2068 = vst.msk [vmem:[%s2007 + $0x1d8] sm:$0xff] %vm2008, %v1988
        %2069 = vst.msk [vmem:[%s2007 + $0x1e0] sm:$0xff] %vm2008, %v1993
        %2070 = vst.msk [vmem:[%s2007 + $0x1e8] sm:$0xff] %vm2008, %v1996
        %2071 = vst.msk [vmem:[%s2007 + $0x1f0] sm:$0xff] %vm2008, %v2001
        %2072 = vst.msk [vmem:[%s2007 + $0x1f8] sm:$0xff] %vm2008, %v2004
      $region33: #{tpu_custom_call.1} parent=27 // loop_footer
        %s153 = sadd.s32 1, %s149
      $region34: #{tpu_custom_call.1} parent=27 // loop_footer_branch
        %148 = sbr.rel target = $region30
      $region35: #{tpu_custom_call.1} parent=27 // loop_exit
        _
      %s2073 = smul.u32 128, %s13
      %p2074 = scmp.lt.s32.totalorder %s2073, 255
      %s2075 = scalar_select %p2074, %s2073, 255
      %s2076 = smul.addr %s2075, 8
      %s2077 = scalar_lea.vmem %s2, %s2076
      // Predicated region
      $region36: #{tpu_custom_call.1} parent=27 // pred_check
        %p2078 = pneg %p78
      $region37: #{tpu_custom_call.1} parent=27 // pred_check_branch
        %2080 = sbr.rel (%p2078) target = $region39
      $region38: #{tpu_custom_call.1} parent=27 // pred_region
        %s2081 = smul.u32 128, %s13
      $region39: #{tpu_custom_call.1} parent=27 // pred_fallthru
        _
    $region28: #{tpu_custom_call.1} parent=5 // pred_fallthru
      _
    %p2082 = scmp.le.s32.totalorder 2, %s8
    // Predicated region
    $region40: #{tpu_custom_call.1} parent=5 // pred_check
      %p2083 = pneg %p2082
    $region41: #{tpu_custom_call.1} parent=5 // pred_check_branch
      %2085 = sbr.rel (%p2083) target = $region43
    $region42: #{tpu_custom_call.1} parent=5 // pred_region
      %s2086 = ssub.s32 %s8, 2
      // Predicated region
      $region44: #{tpu_custom_call.1} parent=42 // pred_check
        %p2087 = pneg %p84
      $region45: #{tpu_custom_call.1} parent=42 // pred_check_branch
        %2089 = sbr.rel (%p2087) target = $region47
      $region46: #{tpu_custom_call.1} parent=42 // pred_region
        %s2090 = smul.u32 128, %s14
        %p2091 = scmp.lt.s32.totalorder %s2090, 255
        %s2092 = scalar_select %p2091, %s2090, 255
        %s2093 = smul.addr %s2092, 8
        %s2094 = scalar_lea.vmem %s2, %s2093
      $region47: #{tpu_custom_call.1} parent=42 // pred_fallthru
        _
    $region43: #{tpu_custom_call.1} parent=5 // pred_fallthru
      _
  $region6: #{tpu_custom_call.1} parent=0 // loop_footer
    %s12 = sadd.s32 1, %s8
  $region7: #{tpu_custom_call.1} parent=0 // loop_footer_branch
    %7 = sbr.rel target = $region3
  $region8: #{tpu_custom_call.1} parent=0 // loop_exit
    _

</llo_original>
